<compile_context>
chip_gen: v6e
topology: v6e:2x2x1
jax: 0.10.0
libtpu: 0.0.40
codegen_flags: <defaults>
</compile_context>

<pallas_src>
import jax
import jax.numpy as jnp
from jax.experimental import pallas as pl
from jax.experimental.pallas import tpu as pltpu

_LANE = 128
_SUBLANE = 8


def _round_up(x, m):
    return (x + m - 1) // m * m


def _encode_dual_kernel(lang_ref, wl_ref, side_ref, wpb_ref, out_ref):
    """One row-tile of the dual-conditioning encoder.

    lang_ref : (TM, 4096)  language features (bf16 or f32)
    wl_ref   : (4096, D)   language weight, zero-padded in the point half
    side_ref : (TM, 3)     columns = [pt_x, pt_y, mask]  (f32)
    wpb_ref  : (3, D)      rows = [wp_x ; wp_y ; bias_cat], zero-padded halves (f32)
    out_ref  : (TM, D)     ((lang @ Wl + pt @ Wp) + b) * mask
    """
    side = side_ref[...]                                     # (TM, 3)

    # Language projection on the MXU, fp32 accumulation.
    acc = jnp.dot(lang_ref[...], wl_ref[...],
                  preferred_element_type=jnp.float32)        # (TM, D)

    # Point projection (K=2) + bias on the VPU: broadcast multiply-adds.
    wpb = wpb_ref[...].astype(jnp.float32)                   # (3, D)
    acc = (acc
           + side[:, 0:1] * wpb[0:1, :]
           + side[:, 1:2] * wpb[1:2, :]
           + wpb[2:3, :])                                    # fused bias row

    # Mask after bias (matches torch: (x @ W + b) * mask); single store.
    out_ref[...] = (acc * side[:, 2:3]).astype(out_ref.dtype)


def prepare_encode_dual_params(w_lang, b_lang, w_point, b_point):
    """Hoisted, init-time parameter fusion (do NOT call per forward step).

    w_lang  : (4096, D/2)  transposed vs torch's (D/2, 4096)
    b_lang  : (D/2,)
    w_point : (2, D/2)     transposed
    b_point : (D/2,)
    returns : wl_pad (4096, D)  language weight zero-padded in the point half
              wpb    (3, D)     rows [wp_x | wp_y | concat(b_lang, b_point)],
                                point rows zero-padded in the language half (f32)
    """
    k_lang, d_half = w_lang.shape
    k_pt = w_point.shape[0]
    assert k_pt == 2, "EncodeDualConditioning.point is a Linear(2, dim//2)"
    dim = 2 * d_half

    wl_pad = jnp.concatenate(
        [w_lang, jnp.zeros((k_lang, d_half), w_lang.dtype)], axis=1)          # (4096, D)
    wp_pad = jnp.concatenate(
        [jnp.zeros((k_pt, d_half), jnp.float32), w_point.astype(jnp.float32)],
        axis=1)                                                               # (2, D)
    b_cat = jnp.concatenate(
        [b_lang.astype(jnp.float32), b_point.astype(jnp.float32)]
    ).reshape(1, dim)                                                         # (1, D)
    wpb = jnp.concatenate([wp_pad, b_cat], axis=0)                            # (3, D)
    return wl_pad, wpb


def _row_tiling(m, tm_max):
    """Pick (row_tile, grid) — sublane-aligned tile, even grid when tiled."""
    if m <= tm_max:
        return m, 1
    grid = pl.cdiv(m, tm_max)
    if grid % 2:
        grid += 1                      # even grid => both v7x TCs get balanced work
    tm = _round_up(pl.cdiv(m, grid), _SUBLANE)
    grid = pl.cdiv(m, tm)
    return tm, grid


def encode_dual_conditioning(language, point, mask, wl_pad, wpb, *, tm=1024):
    """JAX wrapper reproducing EncodeDualConditioning.forward.

    language : (B, S, 4096)  kept in its native dtype (bf16 recommended)
    point    : (B, S, 2)
    mask     : (B, S)
    wl_pad, wpb : from prepare_encode_dual_params (precomputed once)
    returns  : (B, S, D) float32
    """
    B, S, k_lang = language.shape
    k_pt = point.shape[-1]
    dim = wl_pad.shape[1]
    M = B * S

    TM, grid_m = _row_tiling(M, tm)

    lang2 = language.reshape(M, k_lang)                      # no dtype cast (HBM-bound)
    side = jnp.concatenate(
        [point.reshape(M, k_pt).astype(jnp.float32),
         mask.reshape(M, 1).astype(jnp.float32)], axis=1)    # (M, 3)

    lang_itemsize = jnp.dtype(lang2.dtype).itemsize
    w_itemsize = jnp.dtype(wl_pad.dtype).itemsize

    # VMEM budget computed from actual (padded, double-buffered) buffer usage.
    def _buf(rows, cols, itemsize, nbuf=2):
        return nbuf * _round_up(rows, _SUBLANE) * _round_up(cols, _LANE) * itemsize

    vmem_need = (_buf(TM, k_lang, lang_itemsize)             # language tile (x2)
                 + _buf(TM, 3, 4)                            # side tile (x2)
                 + _buf(TM, dim, 4)                          # output tile (x2)
                 + _buf(k_lang, dim, w_itemsize)             # resident language weight
                 + _buf(3, dim, 4))                          # resident point weight+bias
    vmem_limit = int(min(max(vmem_need + 8 * 1024 * 1024, 32 * 1024 * 1024),
                         64 * 1024 * 1024))                  # <= v7x physical VMEM

    cost = pl.CostEstimate(
        flops=2 * M * k_lang * dim + 6 * M * dim,
        transcendentals=0,
        bytes_accessed=(M * k_lang * lang_itemsize           # language read (dominant)
                        + M * 3 * 4                          # side read
                        + M * dim * 4                        # output write
                        + k_lang * dim * w_itemsize          # weight read
                        + 3 * dim * 4),
    )

    out = pl.pallas_call(
        _encode_dual_kernel,
        out_shape=jax.ShapeDtypeStruct((M, dim), jnp.float32),
        grid=(grid_m,),
        in_specs=[
            pl.BlockSpec((TM, k_lang), lambda i: (i, 0)),    # language tile (streamed)
            pl.BlockSpec((k_lang, dim), lambda i: (0, 0)),   # w_lang (resident)
            pl.BlockSpec((TM, 3), lambda i: (i, 0)),         # [pt_x, pt_y, mask] tile
            pl.BlockSpec((3, dim), lambda i: (0, 0)),        # w_point + bias (resident)
        ],
        out_specs=pl.BlockSpec((TM, dim), lambda i: (i, 0)),
        compiler_params=pltpu.CompilerParams(
            dimension_semantics=("parallel",),               # v7x: shard rows over 2 TCs
            vmem_limit_bytes=vmem_limit,
        ),
        cost_estimate=cost,
    )(lang2, wl_pad, side, wpb)

    return out.reshape(B, S, dim)


def _init_linear_params(key, fan_in, fan_out, dtype=jnp.float32):
    """Deterministic init matching torch.nn.Linear's U(-1/sqrt(fan_in), ...)."""
    kw, kb = jax.random.split(key)
    bound = 1.0 / jnp.sqrt(jnp.float32(fan_in))
    w = jax.random.uniform(kw, (fan_in, fan_out), jnp.float32, -bound, bound).astype(dtype)
    b = jax.random.uniform(kb, (fan_out,), jnp.float32, -bound, bound)
    return w, b


def _reference(language, point, mask, w_lang, b_lang, w_point, b_point):
    """Pure-JAX reference of the PyTorch forward (fp32 math on the stored values)."""
    lang_f32 = language.astype(jnp.float32)
    wl_f32 = w_lang.astype(jnp.float32)
    lang_out = (lang_f32 @ wl_f32 + b_lang) * mask[..., None]
    pt_out = (point @ w_point + b_point) * mask[..., None]
    return jnp.concatenate([lang_out, pt_out], axis=-1)


if __name__ == "__main__":
    key = jax.random.PRNGKey(0)
    k_lang_p, k_pt_p, k_lang_x, k_pt_x, k_mask, k_x2, k_p2, k_m2 = jax.random.split(key, 8)

    # Small shapes consistent with the module: dim=32 -> dim//2 = 16.
    B, S, DIM = 2, 8, 32
    D_HALF = DIM // 2
    LANG_IN = 4096
    PT_IN = 2

    # Parameters: language weight kept in bf16 (matches bf16 activations),
    # tiny point weight in f32.
    w_lang, b_lang = _init_linear_params(k_lang_p, LANG_IN, D_HALF, dtype=jnp.bfloat16)
    w_point, b_point = _init_linear_params(k_pt_p, PT_IN, D_HALF, dtype=jnp.float32)

    # Hoisted parameter fusion: padded/fused weights built ONCE (per review).
    wl_pad, wpb = prepare_encode_dual_params(w_lang, b_lang, w_point, b_point)
    wl_pad, wpb = jax.block_until_ready((wl_pad, wpb))

    # Inputs: the dominant language tensor stays in bf16 end-to-end.
    language = jax.random.normal(k_lang_x, (B, S, LANG_IN), jnp.float32).astype(jnp.bfloat16)
    point = jax.random.normal(k_pt_x, (B, S, PT_IN), jnp.float32)
    mask = (jax.random.uniform(k_mask, (B, S)) > 0.3).astype(jnp.float32)

    ref = _reference(language, point, mask, w_lang, b_lang, w_point, b_point)

    # 1) Single-block path (M <= tile).
    out = encode_dual_conditioning(language, point, mask, wl_pad, wpb)
    out = jax.block_until_ready(out)
    assert out.shape == (B, S, DIM), out.shape
    assert jnp.allclose(out, ref, atol=1e-2, rtol=1e-2), float(jnp.abs(out - ref).max())

    # 2) Tiled path: forces an even 2-step grid over the row axis (exercises the
    #    pipelined BlockSpec path / v7x-style two-way split with tiny inputs).
    out_tiled = encode_dual_conditioning(language, point, mask, wl_pad, wpb, tm=8)
    out_tiled = jax.block_until_ready(out_tiled)
    assert jnp.allclose(out_tiled, ref, atol=1e-2, rtol=1e-2), \
        float(jnp.abs(out_tiled - ref).max())

    # 3) Ragged path: M = 10 rows, tiny tile -> TM rounded to 8, grid of 2 with a
    #    half-valid last block (Pallas masks the out-of-bounds output rows).
    B2, S2 = 2, 5
    language2 = jax.random.normal(k_x2, (B2, S2, LANG_IN), jnp.float32).astype(jnp.bfloat16)
    point2 = jax.random.normal(k_p2, (B2, S2, PT_IN), jnp.float32)
    mask2 = (jax.random.uniform(k_m2, (B2, S2)) > 0.3).astype(jnp.float32)
    ref2 = _reference(language2, point2, mask2, w_lang, b_lang, w_point, b_point)
    out2 = encode_dual_conditioning(language2, point2, mask2, wl_pad, wpb, tm=4)
    out2 = jax.block_until_ready(out2)
    assert out2.shape == (B2, S2, DIM), out2.shape
    assert jnp.allclose(out2, ref2, atol=1e-2, rtol=1e-2), \
        float(jnp.abs(out2 - ref2).max())

    print("KERNEL_OK")
</pallas_src>

<mosaic_0001>
module attributes {stable_mosaic.version = 11 : i64} {
  func.func @_encode_dual_kernel(%arg0: i32, %arg1: memref<16x4096xbf16, #tpu.memory_space<vmem>>, %arg2: memref<4096x32xbf16, #tpu.memory_space<vmem>>, %arg3: memref<16x3xf32, #tpu.memory_space<vmem>>, %arg4: memref<3x32xf32, #tpu.memory_space<vmem>>, %arg5: memref<16x32xf32, #tpu.memory_space<vmem>>) attributes {dimension_semantics = [#tpu.dimension_semantics<parallel>], iteration_bounds = array<i64: 1>, scalar_prefetch = 0 : i64, scratch_operands = 0 : i64, tpu.core_type = #tpu.core_type<tc>, window_params = [{transform_indices = @transform_0, window_bounds = array<i64: 16, 4096>}, {pipeline_mode = #tpu.pipeline_mode<synchronous>, transform_indices = @transform_1, window_bounds = array<i64: 4096, 32>}, {transform_indices = @transform_2, window_bounds = array<i64: 16, 3>}, {pipeline_mode = #tpu.pipeline_mode<synchronous>, transform_indices = @transform_3, window_bounds = array<i64: 3, 32>}, {transform_indices = @transform_4, window_bounds = array<i64: 16, 32>}]} {
    %c0 = arith.constant 0 : index
    %c0_0 = arith.constant 0 : index
    %0 = vector.load %arg3[%c0, %c0_0] : memref<16x3xf32, #tpu.memory_space<vmem>>, vector<16x3xf32>
    %c0_1 = arith.constant 0 : index
    %c0_2 = arith.constant 0 : index
    %1 = vector.load %arg1[%c0_1, %c0_2] : memref<16x4096xbf16, #tpu.memory_space<vmem>>, vector<16x4096xbf16>
    %c0_3 = arith.constant 0 : index
    %c0_4 = arith.constant 0 : index
    %2 = vector.load %arg2[%c0_3, %c0_4] : memref<4096x32xbf16, #tpu.memory_space<vmem>>, vector<4096x32xbf16>
    %cst = arith.constant dense<0.000000e+00> : vector<16x32xf32>
    %3 = tpu.matmul %1, %2, %cst {dimension_numbers = #tpu.dot_dimension_numbers<[1], [0], [0], [1], [0, 0, 1, 1], [], []>} : vector<16x4096xbf16>, vector<4096x32xbf16>, vector<16x32xf32> -> vector<16x32xf32>
    %c0_5 = arith.constant 0 : index
    %c0_6 = arith.constant 0 : index
    %4 = vector.load %arg4[%c0_5, %c0_6] : memref<3x32xf32, #tpu.memory_space<vmem>>, vector<3x32xf32>
    %5 = vector.extract_strided_slice %0 {offsets = [0, 0], sizes = [16, 1], strides = [1, 1]} : vector<16x3xf32> to vector<16x1xf32>
    %6 = vector.extract_strided_slice %4 {offsets = [0, 0], sizes = [1, 32], strides = [1, 1]} : vector<3x32xf32> to vector<1x32xf32>
    %7 = vector.broadcast %5 : vector<16x1xf32> to vector<16x32xf32>
    %8 = vector.broadcast %6 : vector<1x32xf32> to vector<16x32xf32>
    %9 = arith.mulf %7, %8 : vector<16x32xf32>
    %10 = arith.addf %3, %9 : vector<16x32xf32>
    %11 = vector.extract_strided_slice %0 {offsets = [0, 1], sizes = [16, 1], strides = [1, 1]} : vector<16x3xf32> to vector<16x1xf32>
    %12 = vector.extract_strided_slice %4 {offsets = [1, 0], sizes = [1, 32], strides = [1, 1]} : vector<3x32xf32> to vector<1x32xf32>
    %13 = vector.broadcast %11 : vector<16x1xf32> to vector<16x32xf32>
    %14 = vector.broadcast %12 : vector<1x32xf32> to vector<16x32xf32>
    %15 = arith.mulf %13, %14 : vector<16x32xf32>
    %16 = arith.addf %10, %15 : vector<16x32xf32>
    %17 = vector.extract_strided_slice %4 {offsets = [2, 0], sizes = [1, 32], strides = [1, 1]} : vector<3x32xf32> to vector<1x32xf32>
    %18 = vector.broadcast %17 : vector<1x32xf32> to vector<16x32xf32>
    %19 = arith.addf %16, %18 : vector<16x32xf32>
    %20 = vector.extract_strided_slice %0 {offsets = [0, 2], sizes = [16, 1], strides = [1, 1]} : vector<16x3xf32> to vector<16x1xf32>
    %21 = vector.broadcast %20 : vector<16x1xf32> to vector<16x32xf32>
    %22 = arith.mulf %19, %21 : vector<16x32xf32>
    %c0_7 = arith.constant 0 : index
    %c0_8 = arith.constant 0 : index
    %23 = vector.load %arg5[%c0_7, %c0_8] : memref<16x32xf32, #tpu.memory_space<vmem>>, vector<16x32xf32>
    tpu.vector_store %arg5[%c0_7, %c0_8], %22 {strides = array<i32>} : memref<16x32xf32, #tpu.memory_space<vmem>>, vector<16x32xf32>,
    return
  }
  func.func @transform_0(%arg0: i32) -> (i32, i32) {
    %c0_i32 = arith.constant 0 : i32
    %c0_i32_0 = arith.constant 0 : i32
    return %arg0, %c0_i32 : i32, i32
  }
  func.func @transform_1(%arg0: i32) -> (i32, i32) {
    %c0_i32 = arith.constant 0 : i32
    %c0_i32_0 = arith.constant 0 : i32
    %c0_i32_1 = arith.constant 0 : i32
    return %c0_i32, %c0_i32_0 : i32, i32
  }
  func.func @transform_2(%arg0: i32) -> (i32, i32) {
    %c0_i32 = arith.constant 0 : i32
    %c0_i32_0 = arith.constant 0 : i32
    return %arg0, %c0_i32 : i32, i32
  }
  func.func @transform_3(%arg0: i32) -> (i32, i32) {
    %c0_i32 = arith.constant 0 : i32
    %c0_i32_0 = arith.constant 0 : i32
    %c0_i32_1 = arith.constant 0 : i32
    return %c0_i32, %c0_i32_0 : i32, i32
  }
  func.func @transform_4(%arg0: i32) -> (i32, i32) {
    %c0_i32 = arith.constant 0 : i32
    %c0_i32_0 = arith.constant 0 : i32
    return %arg0, %c0_i32 : i32, i32
  }
}

</mosaic_0001>

<llo_original>
// kernel: tpu_custom_call.1
$region0: #{tpu_custom_call.1}
  #allocation0 [shape = 'u32[]', space=smem, size = 0x4, offset = 0x4, fixed_abs, tag = 'smem constant byte address 0x4 - core index']
  #allocation1 [shape = 'u32[144,128]{1,0:T(1,128)}', space=vmem, size = 0x12000, scoped, tag = 'internal scratch']
  %s0 = inlined_call_operand.vmem [shape: bf16[16,4096], index: 0, kind: input, shape index: {}]
  %s1 = inlined_call_operand.vmem [shape: bf16[4096,32], index: 1, kind: input, shape index: {}]
  %s2 = inlined_call_operand.vmem [shape: f32[16,3], index: 2, kind: input, shape index: {}]
  %s3 = inlined_call_operand.vmem [shape: f32[3,32], index: 3, kind: input, shape index: {}]
  %s4 = inlined_call_operand.hbm [shape: f32[16,32], index: 4, kind: output, shape index: {}]
  %s5 = sld [smem:[#allocation0]]
  $region26: #{tpu_custom_call.1} parent=0
    _
  %s7 = ssub.s32 1, %s5
  %s8 = scalar_select 0, %s7, %s5
  $region1: #{tpu_custom_call.1} parent=0
    #allocation2 [shape = 'u8[8192]{0}', space=vmem, size = 0x2000, scoped, tag = 'output window, operand 0, single buffered']
    #allocation3 [shape = 's32[1]{0}', space=sflag, size = 0x4, scoped, tag = 'scoped memory for tpu_custom_call.1']
    %9 = vsyncpa [#allocation3], 0
    // Predicated region
    $region2: #{tpu_custom_call.1} parent=1 // pred_check
      _
    $region3: #{tpu_custom_call.1} parent=1 // pred_check_branch
      %11 = sbr.rel (0) target = $region5
    $region4: #{tpu_custom_call.1} parent=1 // pred_region
      _
    $region5: #{tpu_custom_call.1} parent=1 // pred_fallthru
      _
    // Predicated region
    $region6: #{tpu_custom_call.1} parent=1 // pred_check
      _
    $region7: #{tpu_custom_call.1} parent=1 // pred_check_branch
      %13 = sbr.rel (0) target = $region9
    $region8: #{tpu_custom_call.1} parent=1 // pred_region
      _
    $region9: #{tpu_custom_call.1} parent=1 // pred_fallthru
      _
    // Predicated region
    $region10: #{tpu_custom_call.1} parent=1 // pred_check
      _
    $region11: #{tpu_custom_call.1} parent=1 // pred_check_branch
      %15 = sbr.rel (0) target = $region13
    $region12: #{tpu_custom_call.1} parent=1 // pred_region
      _
    $region13: #{tpu_custom_call.1} parent=1 // pred_fallthru
      _
    // Predicated region
    $region14: #{tpu_custom_call.1} parent=1 // pred_check
      _
    $region15: #{tpu_custom_call.1} parent=1 // pred_check_branch
      %17 = sbr.rel (0) target = $region17
    $region16: #{tpu_custom_call.1} parent=1 // pred_region
      _
    $region17: #{tpu_custom_call.1} parent=1 // pred_fallthru
      _
    %v19 = vld [vmem:[%s2] sm:$0xff]
    %v20 = vld [vmem:[%s2 + $0x8] sm:$0xff]
    %v21 = vld [vmem:[%s0] sm:$0xff]
    %v22 = vld [vmem:[%s0 + $0x8] sm:$0xff]
    %v23 = vld [vmem:[%s0 + $0x10] sm:$0xff]
    %v24 = vld [vmem:[%s0 + $0x18] sm:$0xff]
    %v25 = vld [vmem:[%s0 + $0x20] sm:$0xff]
    %v26 = vld [vmem:[%s0 + $0x28] sm:$0xff]
    %v27 = vld [vmem:[%s0 + $0x30] sm:$0xff]
    %v28 = vld [vmem:[%s0 + $0x38] sm:$0xff]
    %v29 = vld [vmem:[%s0 + $0x40] sm:$0xff]
    %v30 = vld [vmem:[%s0 + $0x48] sm:$0xff]
    %v31 = vld [vmem:[%s0 + $0x50] sm:$0xff]
    %v32 = vld [vmem:[%s0 + $0x58] sm:$0xff]
    %v33 = vld [vmem:[%s0 + $0x60] sm:$0xff]
    %v34 = vld [vmem:[%s0 + $0x68] sm:$0xff]
    %v35 = vld [vmem:[%s0 + $0x70] sm:$0xff]
    %v36 = vld [vmem:[%s0 + $0x78] sm:$0xff]
    %v37 = vld [vmem:[%s0 + $0x80] sm:$0xff]
    %v38 = vld [vmem:[%s0 + $0x88] sm:$0xff]
    %v39 = vld [vmem:[%s0 + $0x90] sm:$0xff]
    %v40 = vld [vmem:[%s0 + $0x98] sm:$0xff]
    %v41 = vld [vmem:[%s0 + $0xa0] sm:$0xff]
    %v42 = vld [vmem:[%s0 + $0xa8] sm:$0xff]
    %v43 = vld [vmem:[%s0 + $0xb0] sm:$0xff]
    %v44 = vld [vmem:[%s0 + $0xb8] sm:$0xff]
    %v45 = vld [vmem:[%s0 + $0xc0] sm:$0xff]
    %v46 = vld [vmem:[%s0 + $0xc8] sm:$0xff]
    %v47 = vld [vmem:[%s0 + $0xd0] sm:$0xff]
    %v48 = vld [vmem:[%s0 + $0xd8] sm:$0xff]
    %v49 = vld [vmem:[%s0 + $0xe0] sm:$0xff]
    %v50 = vld [vmem:[%s0 + $0xe8] sm:$0xff]
    %v51 = vld [vmem:[%s0 + $0xf0] sm:$0xff]
    %v52 = vld [vmem:[%s0 + $0xf8] sm:$0xff]
    %v53 = vld [vmem:[%s1] sm:$0xf]
    %v54 = vld [vmem:[%s1 + $0x4] sm:$0xf]
    %v55 = vld [vmem:[%s1 + $0x8] sm:$0xf]
    %v56 = vld [vmem:[%s1 + $0xc] sm:$0xf]
    %v57 = vld [vmem:[%s1 + $0x10] sm:$0xf]
    %v58 = vld [vmem:[%s1 + $0x14] sm:$0xf]
    %v59 = vld [vmem:[%s1 + $0x18] sm:$0xf]
    %v60 = vld [vmem:[%s1 + $0x1c] sm:$0xf]
    %v61 = vld [vmem:[%s1 + $0x20] sm:$0xf]
    %v62 = vld [vmem:[%s1 + $0x24] sm:$0xf]
    %v63 = vld [vmem:[%s1 + $0x28] sm:$0xf]
    %v64 = vld [vmem:[%s1 + $0x2c] sm:$0xf]
    %v65 = vld [vmem:[%s1 + $0x30] sm:$0xf]
    %v66 = vld [vmem:[%s1 + $0x34] sm:$0xf]
    %v67 = vld [vmem:[%s1 + $0x38] sm:$0xf]
    %v68 = vld [vmem:[%s1 + $0x3c] sm:$0xf]
    %v69 = vld [vmem:[%s1 + $0x40] sm:$0xf]
    %v70 = vld [vmem:[%s1 + $0x44] sm:$0xf]
    %v71 = vld [vmem:[%s1 + $0x48] sm:$0xf]
    %v72 = vld [vmem:[%s1 + $0x4c] sm:$0xf]
    %v73 = vld [vmem:[%s1 + $0x50] sm:$0xf]
    %v74 = vld [vmem:[%s1 + $0x54] sm:$0xf]
    %v75 = vld [vmem:[%s1 + $0x58] sm:$0xf]
    %v76 = vld [vmem:[%s1 + $0x5c] sm:$0xf]
    %v77 = vld [vmem:[%s1 + $0x60] sm:$0xf]
    %v78 = vld [vmem:[%s1 + $0x64] sm:$0xf]
    %v79 = vld [vmem:[%s1 + $0x68] sm:$0xf]
    %v80 = vld [vmem:[%s1 + $0x6c] sm:$0xf]
    %v81 = vld [vmem:[%s1 + $0x70] sm:$0xf]
    %v82 = vld [vmem:[%s1 + $0x74] sm:$0xf]
    %v83 = vld [vmem:[%s1 + $0x78] sm:$0xf]
    %v84 = vld [vmem:[%s1 + $0x7c] sm:$0xf]
    %v85 = vld [vmem:[%s1 + $0x80] sm:$0xf]
    %v86 = vld [vmem:[%s1 + $0x84] sm:$0xf]
    %v87 = vld [vmem:[%s1 + $0x88] sm:$0xf]
    %v88 = vld [vmem:[%s1 + $0x8c] sm:$0xf]
    %v89 = vld [vmem:[%s1 + $0x90] sm:$0xf]
    %v90 = vld [vmem:[%s1 + $0x94] sm:$0xf]
    %v91 = vld [vmem:[%s1 + $0x98] sm:$0xf]
    %v92 = vld [vmem:[%s1 + $0x9c] sm:$0xf]
    %v93 = vld [vmem:[%s1 + $0xa0] sm:$0xf]
    %v94 = vld [vmem:[%s1 + $0xa4] sm:$0xf]
    %v95 = vld [vmem:[%s1 + $0xa8] sm:$0xf]
    %v96 = vld [vmem:[%s1 + $0xac] sm:$0xf]
    %v97 = vld [vmem:[%s1 + $0xb0] sm:$0xf]
    %v98 = vld [vmem:[%s1 + $0xb4] sm:$0xf]
    %v99 = vld [vmem:[%s1 + $0xb8] sm:$0xf]
    %v100 = vld [vmem:[%s1 + $0xbc] sm:$0xf]
    %v101 = vld [vmem:[%s1 + $0xc0] sm:$0xf]
    %v102 = vld [vmem:[%s1 + $0xc4] sm:$0xf]
    %v103 = vld [vmem:[%s1 + $0xc8] sm:$0xf]
    %v104 = vld [vmem:[%s1 + $0xcc] sm:$0xf]
    %v105 = vld [vmem:[%s1 + $0xd0] sm:$0xf]
    %v106 = vld [vmem:[%s1 + $0xd4] sm:$0xf]
    %v107 = vld [vmem:[%s1 + $0xd8] sm:$0xf]
    %v108 = vld [vmem:[%s1 + $0xdc] sm:$0xf]
    %v109 = vld [vmem:[%s1 + $0xe0] sm:$0xf]
    %v110 = vld [vmem:[%s1 + $0xe4] sm:$0xf]
    %v111 = vld [vmem:[%s1 + $0xe8] sm:$0xf]
    %v112 = vld [vmem:[%s1 + $0xec] sm:$0xf]
    %v113 = vld [vmem:[%s1 + $0xf0] sm:$0xf]
    %v114 = vld [vmem:[%s1 + $0xf4] sm:$0xf]
    %v115 = vld [vmem:[%s1 + $0xf8] sm:$0xf]
    %v116 = vld [vmem:[%s1 + $0xfc] sm:$0xf]
    %v117 = vld [vmem:[%s1 + $0x100] sm:$0xf]
    %v118 = vld [vmem:[%s1 + $0x104] sm:$0xf]
    %v119 = vld [vmem:[%s1 + $0x108] sm:$0xf]
    %v120 = vld [vmem:[%s1 + $0x10c] sm:$0xf]
    %v121 = vld [vmem:[%s1 + $0x110] sm:$0xf]
    %v122 = vld [vmem:[%s1 + $0x114] sm:$0xf]
    %v123 = vld [vmem:[%s1 + $0x118] sm:$0xf]
    %v124 = vld [vmem:[%s1 + $0x11c] sm:$0xf]
    %v125 = vld [vmem:[%s1 + $0x120] sm:$0xf]
    %v126 = vld [vmem:[%s1 + $0x124] sm:$0xf]
    %v127 = vld [vmem:[%s1 + $0x128] sm:$0xf]
    %v128 = vld [vmem:[%s1 + $0x12c] sm:$0xf]
    %v129 = vld [vmem:[%s1 + $0x130] sm:$0xf]
    %v130 = vld [vmem:[%s1 + $0x134] sm:$0xf]
    %v131 = vld [vmem:[%s1 + $0x138] sm:$0xf]
    %v132 = vld [vmem:[%s1 + $0x13c] sm:$0xf]
    %v133 = vld [vmem:[%s1 + $0x140] sm:$0xf]
    %v134 = vld [vmem:[%s1 + $0x144] sm:$0xf]
    %v135 = vld [vmem:[%s1 + $0x148] sm:$0xf]
    %v136 = vld [vmem:[%s1 + $0x14c] sm:$0xf]
    %v137 = vld [vmem:[%s1 + $0x150] sm:$0xf]
    %v138 = vld [vmem:[%s1 + $0x154] sm:$0xf]
    %v139 = vld [vmem:[%s1 + $0x158] sm:$0xf]
    %v140 = vld [vmem:[%s1 + $0x15c] sm:$0xf]
    %v141 = vld [vmem:[%s1 + $0x160] sm:$0xf]
    %v142 = vld [vmem:[%s1 + $0x164] sm:$0xf]
    %v143 = vld [vmem:[%s1 + $0x168] sm:$0xf]
    %v144 = vld [vmem:[%s1 + $0x16c] sm:$0xf]
    %v145 = vld [vmem:[%s1 + $0x170] sm:$0xf]
    %v146 = vld [vmem:[%s1 + $0x174] sm:$0xf]
    %v147 = vld [vmem:[%s1 + $0x178] sm:$0xf]
    %v148 = vld [vmem:[%s1 + $0x17c] sm:$0xf]
    %v149 = vld [vmem:[%s1 + $0x180] sm:$0xf]
    %v150 = vld [vmem:[%s1 + $0x184] sm:$0xf]
    %v151 = vld [vmem:[%s1 + $0x188] sm:$0xf]
    %v152 = vld [vmem:[%s1 + $0x18c] sm:$0xf]
    %v153 = vld [vmem:[%s1 + $0x190] sm:$0xf]
    %v154 = vld [vmem:[%s1 + $0x194] sm:$0xf]
    %v155 = vld [vmem:[%s1 + $0x198] sm:$0xf]
    %v156 = vld [vmem:[%s1 + $0x19c] sm:$0xf]
    %v157 = vld [vmem:[%s1 + $0x1a0] sm:$0xf]
    %v158 = vld [vmem:[%s1 + $0x1a4] sm:$0xf]
    %v159 = vld [vmem:[%s1 + $0x1a8] sm:$0xf]
    %v160 = vld [vmem:[%s1 + $0x1ac] sm:$0xf]
    %v161 = vld [vmem:[%s1 + $0x1b0] sm:$0xf]
    %v162 = vld [vmem:[%s1 + $0x1b4] sm:$0xf]
    %v163 = vld [vmem:[%s1 + $0x1b8] sm:$0xf]
    %v164 = vld [vmem:[%s1 + $0x1bc] sm:$0xf]
    %v165 = vld [vmem:[%s1 + $0x1c0] sm:$0xf]
    %v166 = vld [vmem:[%s1 + $0x1c4] sm:$0xf]
    %v167 = vld [vmem:[%s1 + $0x1c8] sm:$0xf]
    %v168 = vld [vmem:[%s1 + $0x1cc] sm:$0xf]
    %v169 = vld [vmem:[%s1 + $0x1d0] sm:$0xf]
    %v170 = vld [vmem:[%s1 + $0x1d4] sm:$0xf]
    %v171 = vld [vmem:[%s1 + $0x1d8] sm:$0xf]
    %v172 = vld [vmem:[%s1 + $0x1dc] sm:$0xf]
    %v173 = vld [vmem:[%s1 + $0x1e0] sm:$0xf]
    %v174 = vld [vmem:[%s1 + $0x1e4] sm:$0xf]
    %v175 = vld [vmem:[%s1 + $0x1e8] sm:$0xf]
    %v176 = vld [vmem:[%s1 + $0x1ec] sm:$0xf]
    %v177 = vld [vmem:[%s1 + $0x1f0] sm:$0xf]
    %v178 = vld [vmem:[%s1 + $0x1f4] sm:$0xf]
    %v179 = vld [vmem:[%s1 + $0x1f8] sm:$0xf]
    %v180 = vld [vmem:[%s1 + $0x1fc] sm:$0xf]
    %v181 = vld [vmem:[%s1 + $0x200] sm:$0xf]
    %v182 = vld [vmem:[%s1 + $0x204] sm:$0xf]
    %v183 = vld [vmem:[%s1 + $0x208] sm:$0xf]
    %v184 = vld [vmem:[%s1 + $0x20c] sm:$0xf]
    %v185 = vld [vmem:[%s1 + $0x210] sm:$0xf]
    %v186 = vld [vmem:[%s1 + $0x214] sm:$0xf]
    %v187 = vld [vmem:[%s1 + $0x218] sm:$0xf]
    %v188 = vld [vmem:[%s1 + $0x21c] sm:$0xf]
    %v189 = vld [vmem:[%s1 + $0x220] sm:$0xf]
    %v190 = vld [vmem:[%s1 + $0x224] sm:$0xf]
    %v191 = vld [vmem:[%s1 + $0x228] sm:$0xf]
    %v192 = vld [vmem:[%s1 + $0x22c] sm:$0xf]
    %v193 = vld [vmem:[%s1 + $0x230] sm:$0xf]
    %v194 = vld [vmem:[%s1 + $0x234] sm:$0xf]
    %v195 = vld [vmem:[%s1 + $0x238] sm:$0xf]
    %v196 = vld [vmem:[%s1 + $0x23c] sm:$0xf]
    %v197 = vld [vmem:[%s1 + $0x240] sm:$0xf]
    %v198 = vld [vmem:[%s1 + $0x244] sm:$0xf]
    %v199 = vld [vmem:[%s1 + $0x248] sm:$0xf]
    %v200 = vld [vmem:[%s1 + $0x24c] sm:$0xf]
    %v201 = vld [vmem:[%s1 + $0x250] sm:$0xf]
    %v202 = vld [vmem:[%s1 + $0x254] sm:$0xf]
    %v203 = vld [vmem:[%s1 + $0x258] sm:$0xf]
    %v204 = vld [vmem:[%s1 + $0x25c] sm:$0xf]
    %v205 = vld [vmem:[%s1 + $0x260] sm:$0xf]
    %v206 = vld [vmem:[%s1 + $0x264] sm:$0xf]
    %v207 = vld [vmem:[%s1 + $0x268] sm:$0xf]
    %v208 = vld [vmem:[%s1 + $0x26c] sm:$0xf]
    %v209 = vld [vmem:[%s1 + $0x270] sm:$0xf]
    %v210 = vld [vmem:[%s1 + $0x274] sm:$0xf]
    %v211 = vld [vmem:[%s1 + $0x278] sm:$0xf]
    %v212 = vld [vmem:[%s1 + $0x27c] sm:$0xf]
    %v213 = vld [vmem:[%s1 + $0x280] sm:$0xf]
    %v214 = vld [vmem:[%s1 + $0x284] sm:$0xf]
    %v215 = vld [vmem:[%s1 + $0x288] sm:$0xf]
    %v216 = vld [vmem:[%s1 + $0x28c] sm:$0xf]
    %v217 = vld [vmem:[%s1 + $0x290] sm:$0xf]
    %v218 = vld [vmem:[%s1 + $0x294] sm:$0xf]
    %v219 = vld [vmem:[%s1 + $0x298] sm:$0xf]
    %v220 = vld [vmem:[%s1 + $0x29c] sm:$0xf]
    %v221 = vld [vmem:[%s1 + $0x2a0] sm:$0xf]
    %v222 = vld [vmem:[%s1 + $0x2a4] sm:$0xf]
    %v223 = vld [vmem:[%s1 + $0x2a8] sm:$0xf]
    %v224 = vld [vmem:[%s1 + $0x2ac] sm:$0xf]
    %v225 = vld [vmem:[%s1 + $0x2b0] sm:$0xf]
    %v226 = vld [vmem:[%s1 + $0x2b4] sm:$0xf]
    %v227 = vld [vmem:[%s1 + $0x2b8] sm:$0xf]
    %v228 = vld [vmem:[%s1 + $0x2bc] sm:$0xf]
    %v229 = vld [vmem:[%s1 + $0x2c0] sm:$0xf]
    %v230 = vld [vmem:[%s1 + $0x2c4] sm:$0xf]
    %v231 = vld [vmem:[%s1 + $0x2c8] sm:$0xf]
    %v232 = vld [vmem:[%s1 + $0x2cc] sm:$0xf]
    %v233 = vld [vmem:[%s1 + $0x2d0] sm:$0xf]
    %v234 = vld [vmem:[%s1 + $0x2d4] sm:$0xf]
    %v235 = vld [vmem:[%s1 + $0x2d8] sm:$0xf]
    %v236 = vld [vmem:[%s1 + $0x2dc] sm:$0xf]
    %v237 = vld [vmem:[%s1 + $0x2e0] sm:$0xf]
    %v238 = vld [vmem:[%s1 + $0x2e4] sm:$0xf]
    %v239 = vld [vmem:[%s1 + $0x2e8] sm:$0xf]
    %v240 = vld [vmem:[%s1 + $0x2ec] sm:$0xf]
    %v241 = vld [vmem:[%s1 + $0x2f0] sm:$0xf]
    %v242 = vld [vmem:[%s1 + $0x2f4] sm:$0xf]
    %v243 = vld [vmem:[%s1 + $0x2f8] sm:$0xf]
    %v244 = vld [vmem:[%s1 + $0x2fc] sm:$0xf]
    %v245 = vld [vmem:[%s1 + $0x300] sm:$0xf]
    %v246 = vld [vmem:[%s1 + $0x304] sm:$0xf]
    %v247 = vld [vmem:[%s1 + $0x308] sm:$0xf]
    %v248 = vld [vmem:[%s1 + $0x30c] sm:$0xf]
    %v249 = vld [vmem:[%s1 + $0x310] sm:$0xf]
    %v250 = vld [vmem:[%s1 + $0x314] sm:$0xf]
    %v251 = vld [vmem:[%s1 + $0x318] sm:$0xf]
    %v252 = vld [vmem:[%s1 + $0x31c] sm:$0xf]
    %v253 = vld [vmem:[%s1 + $0x320] sm:$0xf]
    %v254 = vld [vmem:[%s1 + $0x324] sm:$0xf]
    %v255 = vld [vmem:[%s1 + $0x328] sm:$0xf]
    %v256 = vld [vmem:[%s1 + $0x32c] sm:$0xf]
    %v257 = vld [vmem:[%s1 + $0x330] sm:$0xf]
    %v258 = vld [vmem:[%s1 + $0x334] sm:$0xf]
    %v259 = vld [vmem:[%s1 + $0x338] sm:$0xf]
    %v260 = vld [vmem:[%s1 + $0x33c] sm:$0xf]
    %v261 = vld [vmem:[%s1 + $0x340] sm:$0xf]
    %v262 = vld [vmem:[%s1 + $0x344] sm:$0xf]
    %v263 = vld [vmem:[%s1 + $0x348] sm:$0xf]
    %v264 = vld [vmem:[%s1 + $0x34c] sm:$0xf]
    %v265 = vld [vmem:[%s1 + $0x350] sm:$0xf]
    %v266 = vld [vmem:[%s1 + $0x354] sm:$0xf]
    %v267 = vld [vmem:[%s1 + $0x358] sm:$0xf]
    %v268 = vld [vmem:[%s1 + $0x35c] sm:$0xf]
    %v269 = vld [vmem:[%s1 + $0x360] sm:$0xf]
    %v270 = vld [vmem:[%s1 + $0x364] sm:$0xf]
    %v271 = vld [vmem:[%s1 + $0x368] sm:$0xf]
    %v272 = vld [vmem:[%s1 + $0x36c] sm:$0xf]
    %v273 = vld [vmem:[%s1 + $0x370] sm:$0xf]
    %v274 = vld [vmem:[%s1 + $0x374] sm:$0xf]
    %v275 = vld [vmem:[%s1 + $0x378] sm:$0xf]
    %v276 = vld [vmem:[%s1 + $0x37c] sm:$0xf]
    %v277 = vld [vmem:[%s1 + $0x380] sm:$0xf]
    %v278 = vld [vmem:[%s1 + $0x384] sm:$0xf]
    %v279 = vld [vmem:[%s1 + $0x388] sm:$0xf]
    %v280 = vld [vmem:[%s1 + $0x38c] sm:$0xf]
    %v281 = vld [vmem:[%s1 + $0x390] sm:$0xf]
    %v282 = vld [vmem:[%s1 + $0x394] sm:$0xf]
    %v283 = vld [vmem:[%s1 + $0x398] sm:$0xf]
    %v284 = vld [vmem:[%s1 + $0x39c] sm:$0xf]
    %v285 = vld [vmem:[%s1 + $0x3a0] sm:$0xf]
    %v286 = vld [vmem:[%s1 + $0x3a4] sm:$0xf]
    %v287 = vld [vmem:[%s1 + $0x3a8] sm:$0xf]
    %v288 = vld [vmem:[%s1 + $0x3ac] sm:$0xf]
    %v289 = vld [vmem:[%s1 + $0x3b0] sm:$0xf]
    %v290 = vld [vmem:[%s1 + $0x3b4] sm:$0xf]
    %v291 = vld [vmem:[%s1 + $0x3b8] sm:$0xf]
    %v292 = vld [vmem:[%s1 + $0x3bc] sm:$0xf]
    %v293 = vld [vmem:[%s1 + $0x3c0] sm:$0xf]
    %v294 = vld [vmem:[%s1 + $0x3c4] sm:$0xf]
    %v295 = vld [vmem:[%s1 + $0x3c8] sm:$0xf]
    %v296 = vld [vmem:[%s1 + $0x3cc] sm:$0xf]
    %v297 = vld [vmem:[%s1 + $0x3d0] sm:$0xf]
    %v298 = vld [vmem:[%s1 + $0x3d4] sm:$0xf]
    %v299 = vld [vmem:[%s1 + $0x3d8] sm:$0xf]
    %v300 = vld [vmem:[%s1 + $0x3dc] sm:$0xf]
    %v301 = vld [vmem:[%s1 + $0x3e0] sm:$0xf]
    %v302 = vld [vmem:[%s1 + $0x3e4] sm:$0xf]
    %v303 = vld [vmem:[%s1 + $0x3e8] sm:$0xf]
    %v304 = vld [vmem:[%s1 + $0x3ec] sm:$0xf]
    %v305 = vld [vmem:[%s1 + $0x3f0] sm:$0xf]
    %v306 = vld [vmem:[%s1 + $0x3f4] sm:$0xf]
    %v307 = vld [vmem:[%s1 + $0x3f8] sm:$0xf]
    %v308 = vld [vmem:[%s1 + $0x3fc] sm:$0xf]
    %v309 = vld [vmem:[%s1 + $0x400] sm:$0xf]
    %v310 = vld [vmem:[%s1 + $0x404] sm:$0xf]
    %v311 = vld [vmem:[%s1 + $0x408] sm:$0xf]
    %v312 = vld [vmem:[%s1 + $0x40c] sm:$0xf]
    %v313 = vld [vmem:[%s1 + $0x410] sm:$0xf]
    %v314 = vld [vmem:[%s1 + $0x414] sm:$0xf]
    %v315 = vld [vmem:[%s1 + $0x418] sm:$0xf]
    %v316 = vld [vmem:[%s1 + $0x41c] sm:$0xf]
    %v317 = vld [vmem:[%s1 + $0x420] sm:$0xf]
    %v318 = vld [vmem:[%s1 + $0x424] sm:$0xf]
    %v319 = vld [vmem:[%s1 + $0x428] sm:$0xf]
    %v320 = vld [vmem:[%s1 + $0x42c] sm:$0xf]
    %v321 = vld [vmem:[%s1 + $0x430] sm:$0xf]
    %v322 = vld [vmem:[%s1 + $0x434] sm:$0xf]
    %v323 = vld [vmem:[%s1 + $0x438] sm:$0xf]
    %v324 = vld [vmem:[%s1 + $0x43c] sm:$0xf]
    %v325 = vld [vmem:[%s1 + $0x440] sm:$0xf]
    %v326 = vld [vmem:[%s1 + $0x444] sm:$0xf]
    %v327 = vld [vmem:[%s1 + $0x448] sm:$0xf]
    %v328 = vld [vmem:[%s1 + $0x44c] sm:$0xf]
    %v329 = vld [vmem:[%s1 + $0x450] sm:$0xf]
    %v330 = vld [vmem:[%s1 + $0x454] sm:$0xf]
    %v331 = vld [vmem:[%s1 + $0x458] sm:$0xf]
    %v332 = vld [vmem:[%s1 + $0x45c] sm:$0xf]
    %v333 = vld [vmem:[%s1 + $0x460] sm:$0xf]
    %v334 = vld [vmem:[%s1 + $0x464] sm:$0xf]
    %v335 = vld [vmem:[%s1 + $0x468] sm:$0xf]
    %v336 = vld [vmem:[%s1 + $0x46c] sm:$0xf]
    %v337 = vld [vmem:[%s1 + $0x470] sm:$0xf]
    %v338 = vld [vmem:[%s1 + $0x474] sm:$0xf]
    %v339 = vld [vmem:[%s1 + $0x478] sm:$0xf]
    %v340 = vld [vmem:[%s1 + $0x47c] sm:$0xf]
    %v341 = vld [vmem:[%s1 + $0x480] sm:$0xf]
    %v342 = vld [vmem:[%s1 + $0x484] sm:$0xf]
    %v343 = vld [vmem:[%s1 + $0x488] sm:$0xf]
    %v344 = vld [vmem:[%s1 + $0x48c] sm:$0xf]
    %v345 = vld [vmem:[%s1 + $0x490] sm:$0xf]
    %v346 = vld [vmem:[%s1 + $0x494] sm:$0xf]
    %v347 = vld [vmem:[%s1 + $0x498] sm:$0xf]
    %v348 = vld [vmem:[%s1 + $0x49c] sm:$0xf]
    %v349 = vld [vmem:[%s1 + $0x4a0] sm:$0xf]
    %v350 = vld [vmem:[%s1 + $0x4a4] sm:$0xf]
    %v351 = vld [vmem:[%s1 + $0x4a8] sm:$0xf]
    %v352 = vld [vmem:[%s1 + $0x4ac] sm:$0xf]
    %v353 = vld [vmem:[%s1 + $0x4b0] sm:$0xf]
    %v354 = vld [vmem:[%s1 + $0x4b4] sm:$0xf]
    %v355 = vld [vmem:[%s1 + $0x4b8] sm:$0xf]
    %v356 = vld [vmem:[%s1 + $0x4bc] sm:$0xf]
    %v357 = vld [vmem:[%s1 + $0x4c0] sm:$0xf]
    %v358 = vld [vmem:[%s1 + $0x4c4] sm:$0xf]
    %v359 = vld [vmem:[%s1 + $0x4c8] sm:$0xf]
    %v360 = vld [vmem:[%s1 + $0x4cc] sm:$0xf]
    %v361 = vld [vmem:[%s1 + $0x4d0] sm:$0xf]
    %v362 = vld [vmem:[%s1 + $0x4d4] sm:$0xf]
    %v363 = vld [vmem:[%s1 + $0x4d8] sm:$0xf]
    %v364 = vld [vmem:[%s1 + $0x4dc] sm:$0xf]
    %v365 = vld [vmem:[%s1 + $0x4e0] sm:$0xf]
    %v366 = vld [vmem:[%s1 + $0x4e4] sm:$0xf]
    %v367 = vld [vmem:[%s1 + $0x4e8] sm:$0xf]
    %v368 = vld [vmem:[%s1 + $0x4ec] sm:$0xf]
    %v369 = vld [vmem:[%s1 + $0x4f0] sm:$0xf]
    %v370 = vld [vmem:[%s1 + $0x4f4] sm:$0xf]
    %v371 = vld [vmem:[%s1 + $0x4f8] sm:$0xf]
    %v372 = vld [vmem:[%s1 + $0x4fc] sm:$0xf]
    %v373 = vld [vmem:[%s1 + $0x500] sm:$0xf]
    %v374 = vld [vmem:[%s1 + $0x504] sm:$0xf]
    %v375 = vld [vmem:[%s1 + $0x508] sm:$0xf]
    %v376 = vld [vmem:[%s1 + $0x50c] sm:$0xf]
    %v377 = vld [vmem:[%s1 + $0x510] sm:$0xf]
    %v378 = vld [vmem:[%s1 + $0x514] sm:$0xf]
    %v379 = vld [vmem:[%s1 + $0x518] sm:$0xf]
    %v380 = vld [vmem:[%s1 + $0x51c] sm:$0xf]
    %v381 = vld [vmem:[%s1 + $0x520] sm:$0xf]
    %v382 = vld [vmem:[%s1 + $0x524] sm:$0xf]
    %v383 = vld [vmem:[%s1 + $0x528] sm:$0xf]
    %v384 = vld [vmem:[%s1 + $0x52c] sm:$0xf]
    %v385 = vld [vmem:[%s1 + $0x530] sm:$0xf]
    %v386 = vld [vmem:[%s1 + $0x534] sm:$0xf]
    %v387 = vld [vmem:[%s1 + $0x538] sm:$0xf]
    %v388 = vld [vmem:[%s1 + $0x53c] sm:$0xf]
    %v389 = vld [vmem:[%s1 + $0x540] sm:$0xf]
    %v390 = vld [vmem:[%s1 + $0x544] sm:$0xf]
    %v391 = vld [vmem:[%s1 + $0x548] sm:$0xf]
    %v392 = vld [vmem:[%s1 + $0x54c] sm:$0xf]
    %v393 = vld [vmem:[%s1 + $0x550] sm:$0xf]
    %v394 = vld [vmem:[%s1 + $0x554] sm:$0xf]
    %v395 = vld [vmem:[%s1 + $0x558] sm:$0xf]
    %v396 = vld [vmem:[%s1 + $0x55c] sm:$0xf]
    %v397 = vld [vmem:[%s1 + $0x560] sm:$0xf]
    %v398 = vld [vmem:[%s1 + $0x564] sm:$0xf]
    %v399 = vld [vmem:[%s1 + $0x568] sm:$0xf]
    %v400 = vld [vmem:[%s1 + $0x56c] sm:$0xf]
    %v401 = vld [vmem:[%s1 + $0x570] sm:$0xf]
    %v402 = vld [vmem:[%s1 + $0x574] sm:$0xf]
    %v403 = vld [vmem:[%s1 + $0x578] sm:$0xf]
    %v404 = vld [vmem:[%s1 + $0x57c] sm:$0xf]
    %v405 = vld [vmem:[%s1 + $0x580] sm:$0xf]
    %v406 = vld [vmem:[%s1 + $0x584] sm:$0xf]
    %v407 = vld [vmem:[%s1 + $0x588] sm:$0xf]
    %v408 = vld [vmem:[%s1 + $0x58c] sm:$0xf]
    %v409 = vld [vmem:[%s1 + $0x590] sm:$0xf]
    %v410 = vld [vmem:[%s1 + $0x594] sm:$0xf]
    %v411 = vld [vmem:[%s1 + $0x598] sm:$0xf]
    %v412 = vld [vmem:[%s1 + $0x59c] sm:$0xf]
    %v413 = vld [vmem:[%s1 + $0x5a0] sm:$0xf]
    %v414 = vld [vmem:[%s1 + $0x5a4] sm:$0xf]
    %v415 = vld [vmem:[%s1 + $0x5a8] sm:$0xf]
    %v416 = vld [vmem:[%s1 + $0x5ac] sm:$0xf]
    %v417 = vld [vmem:[%s1 + $0x5b0] sm:$0xf]
    %v418 = vld [vmem:[%s1 + $0x5b4] sm:$0xf]
    %v419 = vld [vmem:[%s1 + $0x5b8] sm:$0xf]
    %v420 = vld [vmem:[%s1 + $0x5bc] sm:$0xf]
    %v421 = vld [vmem:[%s1 + $0x5c0] sm:$0xf]
    %v422 = vld [vmem:[%s1 + $0x5c4] sm:$0xf]
    %v423 = vld [vmem:[%s1 + $0x5c8] sm:$0xf]
    %v424 = vld [vmem:[%s1 + $0x5cc] sm:$0xf]
    %v425 = vld [vmem:[%s1 + $0x5d0] sm:$0xf]
    %v426 = vld [vmem:[%s1 + $0x5d4] sm:$0xf]
    %v427 = vld [vmem:[%s1 + $0x5d8] sm:$0xf]
    %v428 = vld [vmem:[%s1 + $0x5dc] sm:$0xf]
    %v429 = vld [vmem:[%s1 + $0x5e0] sm:$0xf]
    %v430 = vld [vmem:[%s1 + $0x5e4] sm:$0xf]
    %v431 = vld [vmem:[%s1 + $0x5e8] sm:$0xf]
    %v432 = vld [vmem:[%s1 + $0x5ec] sm:$0xf]
    %v433 = vld [vmem:[%s1 + $0x5f0] sm:$0xf]
    %v434 = vld [vmem:[%s1 + $0x5f4] sm:$0xf]
    %v435 = vld [vmem:[%s1 + $0x5f8] sm:$0xf]
    %v436 = vld [vmem:[%s1 + $0x5fc] sm:$0xf]
    %v437 = vld [vmem:[%s1 + $0x600] sm:$0xf]
    %v438 = vld [vmem:[%s1 + $0x604] sm:$0xf]
    %v439 = vld [vmem:[%s1 + $0x608] sm:$0xf]
    %v440 = vld [vmem:[%s1 + $0x60c] sm:$0xf]
    %v441 = vld [vmem:[%s1 + $0x610] sm:$0xf]
    %v442 = vld [vmem:[%s1 + $0x614] sm:$0xf]
    %v443 = vld [vmem:[%s1 + $0x618] sm:$0xf]
    %v444 = vld [vmem:[%s1 + $0x61c] sm:$0xf]
    %v445 = vld [vmem:[%s1 + $0x620] sm:$0xf]
    %v446 = vld [vmem:[%s1 + $0x624] sm:$0xf]
    %v447 = vld [vmem:[%s1 + $0x628] sm:$0xf]
    %v448 = vld [vmem:[%s1 + $0x62c] sm:$0xf]
    %v449 = vld [vmem:[%s1 + $0x630] sm:$0xf]
    %v450 = vld [vmem:[%s1 + $0x634] sm:$0xf]
    %v451 = vld [vmem:[%s1 + $0x638] sm:$0xf]
    %v452 = vld [vmem:[%s1 + $0x63c] sm:$0xf]
    %v453 = vld [vmem:[%s1 + $0x640] sm:$0xf]
    %v454 = vld [vmem:[%s1 + $0x644] sm:$0xf]
    %v455 = vld [vmem:[%s1 + $0x648] sm:$0xf]
    %v456 = vld [vmem:[%s1 + $0x64c] sm:$0xf]
    %v457 = vld [vmem:[%s1 + $0x650] sm:$0xf]
    %v458 = vld [vmem:[%s1 + $0x654] sm:$0xf]
    %v459 = vld [vmem:[%s1 + $0x658] sm:$0xf]
    %v460 = vld [vmem:[%s1 + $0x65c] sm:$0xf]
    %v461 = vld [vmem:[%s1 + $0x660] sm:$0xf]
    %v462 = vld [vmem:[%s1 + $0x664] sm:$0xf]
    %v463 = vld [vmem:[%s1 + $0x668] sm:$0xf]
    %v464 = vld [vmem:[%s1 + $0x66c] sm:$0xf]
    %v465 = vld [vmem:[%s1 + $0x670] sm:$0xf]
    %v466 = vld [vmem:[%s1 + $0x674] sm:$0xf]
    %v467 = vld [vmem:[%s1 + $0x678] sm:$0xf]
    %v468 = vld [vmem:[%s1 + $0x67c] sm:$0xf]
    %v469 = vld [vmem:[%s1 + $0x680] sm:$0xf]
    %v470 = vld [vmem:[%s1 + $0x684] sm:$0xf]
    %v471 = vld [vmem:[%s1 + $0x688] sm:$0xf]
    %v472 = vld [vmem:[%s1 + $0x68c] sm:$0xf]
    %v473 = vld [vmem:[%s1 + $0x690] sm:$0xf]
    %v474 = vld [vmem:[%s1 + $0x694] sm:$0xf]
    %v475 = vld [vmem:[%s1 + $0x698] sm:$0xf]
    %v476 = vld [vmem:[%s1 + $0x69c] sm:$0xf]
    %v477 = vld [vmem:[%s1 + $0x6a0] sm:$0xf]
    %v478 = vld [vmem:[%s1 + $0x6a4] sm:$0xf]
    %v479 = vld [vmem:[%s1 + $0x6a8] sm:$0xf]
    %v480 = vld [vmem:[%s1 + $0x6ac] sm:$0xf]
    %v481 = vld [vmem:[%s1 + $0x6b0] sm:$0xf]
    %v482 = vld [vmem:[%s1 + $0x6b4] sm:$0xf]
    %v483 = vld [vmem:[%s1 + $0x6b8] sm:$0xf]
    %v484 = vld [vmem:[%s1 + $0x6bc] sm:$0xf]
    %v485 = vld [vmem:[%s1 + $0x6c0] sm:$0xf]
    %v486 = vld [vmem:[%s1 + $0x6c4] sm:$0xf]
    %v487 = vld [vmem:[%s1 + $0x6c8] sm:$0xf]
    %v488 = vld [vmem:[%s1 + $0x6cc] sm:$0xf]
    %v489 = vld [vmem:[%s1 + $0x6d0] sm:$0xf]
    %v490 = vld [vmem:[%s1 + $0x6d4] sm:$0xf]
    %v491 = vld [vmem:[%s1 + $0x6d8] sm:$0xf]
    %v492 = vld [vmem:[%s1 + $0x6dc] sm:$0xf]
    %v493 = vld [vmem:[%s1 + $0x6e0] sm:$0xf]
    %v494 = vld [vmem:[%s1 + $0x6e4] sm:$0xf]
    %v495 = vld [vmem:[%s1 + $0x6e8] sm:$0xf]
    %v496 = vld [vmem:[%s1 + $0x6ec] sm:$0xf]
    %v497 = vld [vmem:[%s1 + $0x6f0] sm:$0xf]
    %v498 = vld [vmem:[%s1 + $0x6f4] sm:$0xf]
    %v499 = vld [vmem:[%s1 + $0x6f8] sm:$0xf]
    %v500 = vld [vmem:[%s1 + $0x6fc] sm:$0xf]
    %v501 = vld [vmem:[%s1 + $0x700] sm:$0xf]
    %v502 = vld [vmem:[%s1 + $0x704] sm:$0xf]
    %v503 = vld [vmem:[%s1 + $0x708] sm:$0xf]
    %v504 = vld [vmem:[%s1 + $0x70c] sm:$0xf]
    %v505 = vld [vmem:[%s1 + $0x710] sm:$0xf]
    %v506 = vld [vmem:[%s1 + $0x714] sm:$0xf]
    %v507 = vld [vmem:[%s1 + $0x718] sm:$0xf]
    %v508 = vld [vmem:[%s1 + $0x71c] sm:$0xf]
    %v509 = vld [vmem:[%s1 + $0x720] sm:$0xf]
    %v510 = vld [vmem:[%s1 + $0x724] sm:$0xf]
    %v511 = vld [vmem:[%s1 + $0x728] sm:$0xf]
    %v512 = vld [vmem:[%s1 + $0x72c] sm:$0xf]
    %v513 = vld [vmem:[%s1 + $0x730] sm:$0xf]
    %v514 = vld [vmem:[%s1 + $0x734] sm:$0xf]
    %v515 = vld [vmem:[%s1 + $0x738] sm:$0xf]
    %v516 = vld [vmem:[%s1 + $0x73c] sm:$0xf]
    %v517 = vld [vmem:[%s1 + $0x740] sm:$0xf]
    %v518 = vld [vmem:[%s1 + $0x744] sm:$0xf]
    %v519 = vld [vmem:[%s1 + $0x748] sm:$0xf]
    %v520 = vld [vmem:[%s1 + $0x74c] sm:$0xf]
    %v521 = vld [vmem:[%s1 + $0x750] sm:$0xf]
    %v522 = vld [vmem:[%s1 + $0x754] sm:$0xf]
    %v523 = vld [vmem:[%s1 + $0x758] sm:$0xf]
    %v524 = vld [vmem:[%s1 + $0x75c] sm:$0xf]
    %v525 = vld [vmem:[%s1 + $0x760] sm:$0xf]
    %v526 = vld [vmem:[%s1 + $0x764] sm:$0xf]
    %v527 = vld [vmem:[%s1 + $0x768] sm:$0xf]
    %v528 = vld [vmem:[%s1 + $0x76c] sm:$0xf]
    %v529 = vld [vmem:[%s1 + $0x770] sm:$0xf]
    %v530 = vld [vmem:[%s1 + $0x774] sm:$0xf]
    %v531 = vld [vmem:[%s1 + $0x778] sm:$0xf]
    %v532 = vld [vmem:[%s1 + $0x77c] sm:$0xf]
    %v533 = vld [vmem:[%s1 + $0x780] sm:$0xf]
    %v534 = vld [vmem:[%s1 + $0x784] sm:$0xf]
    %v535 = vld [vmem:[%s1 + $0x788] sm:$0xf]
    %v536 = vld [vmem:[%s1 + $0x78c] sm:$0xf]
    %v537 = vld [vmem:[%s1 + $0x790] sm:$0xf]
    %v538 = vld [vmem:[%s1 + $0x794] sm:$0xf]
    %v539 = vld [vmem:[%s1 + $0x798] sm:$0xf]
    %v540 = vld [vmem:[%s1 + $0x79c] sm:$0xf]
    %v541 = vld [vmem:[%s1 + $0x7a0] sm:$0xf]
    %v542 = vld [vmem:[%s1 + $0x7a4] sm:$0xf]
    %v543 = vld [vmem:[%s1 + $0x7a8] sm:$0xf]
    %v544 = vld [vmem:[%s1 + $0x7ac] sm:$0xf]
    %v545 = vld [vmem:[%s1 + $0x7b0] sm:$0xf]
    %v546 = vld [vmem:[%s1 + $0x7b4] sm:$0xf]
    %v547 = vld [vmem:[%s1 + $0x7b8] sm:$0xf]
    %v548 = vld [vmem:[%s1 + $0x7bc] sm:$0xf]
    %v549 = vld [vmem:[%s1 + $0x7c0] sm:$0xf]
    %v550 = vld [vmem:[%s1 + $0x7c4] sm:$0xf]
    %v551 = vld [vmem:[%s1 + $0x7c8] sm:$0xf]
    %v552 = vld [vmem:[%s1 + $0x7cc] sm:$0xf]
    %v553 = vld [vmem:[%s1 + $0x7d0] sm:$0xf]
    %v554 = vld [vmem:[%s1 + $0x7d4] sm:$0xf]
    %v555 = vld [vmem:[%s1 + $0x7d8] sm:$0xf]
    %v556 = vld [vmem:[%s1 + $0x7dc] sm:$0xf]
    %v557 = vld [vmem:[%s1 + $0x7e0] sm:$0xf]
    %v558 = vld [vmem:[%s1 + $0x7e4] sm:$0xf]
    %v559 = vld [vmem:[%s1 + $0x7e8] sm:$0xf]
    %v560 = vld [vmem:[%s1 + $0x7ec] sm:$0xf]
    %v561 = vld [vmem:[%s1 + $0x7f0] sm:$0xf]
    %v562 = vld [vmem:[%s1 + $0x7f4] sm:$0xf]
    %v563 = vld [vmem:[%s1 + $0x7f8] sm:$0xf]
    %v564 = vld [vmem:[%s1 + $0x7fc] sm:$0xf]
    %v565 = vld [vmem:[%s3] sm:$0x7]
    %567 = vset.pattern.permute.xlu0 0
    %568 = vperm.xlu0 %567, %v19
    %v569 = vpop.permute.xlu0 %568
    %572 = vset.pattern.permute.xlu0 0
    %573 = vperm.xlu0 %572, %v20
    %v574 = vpop.permute.xlu0 %573
    %v576 = vlaneseq
    %v577 = vshrl.u32 %v576, 7
    %v578 = vsub.s32 0, %v577
    %v579 = vrot.slane %v565, %v578
    %v580 = vmul.f32 %v569, %v579
    %v581 = vmul.f32 %v574, %v579
    %v614 = vunpack.c.l.b16 %v21
    %v615 = vunpack.c.h.b16 %v21
    %v616 = vunpack.c.l.b16 %v22
    %v617 = vunpack.c.h.b16 %v22
    %v618 = vunpack.c.l.b16 %v23
    %v619 = vunpack.c.h.b16 %v23
    %v620 = vunpack.c.l.b16 %v24
    %v621 = vunpack.c.h.b16 %v24
    %v622 = vunpack.c.l.b16 %v25
    %v623 = vunpack.c.h.b16 %v25
    %v624 = vunpack.c.l.b16 %v26
    %v625 = vunpack.c.h.b16 %v26
    %v626 = vunpack.c.l.b16 %v27
    %v627 = vunpack.c.h.b16 %v27
    %v628 = vunpack.c.l.b16 %v28
    %v629 = vunpack.c.h.b16 %v28
    %v630 = vunpack.c.l.b16 %v29
    %v631 = vunpack.c.h.b16 %v29
    %v632 = vunpack.c.l.b16 %v30
    %v633 = vunpack.c.h.b16 %v30
    %v634 = vunpack.c.l.b16 %v31
    %v635 = vunpack.c.h.b16 %v31
    %v636 = vunpack.c.l.b16 %v32
    %v637 = vunpack.c.h.b16 %v32
    %v638 = vunpack.c.l.b16 %v33
    %v639 = vunpack.c.h.b16 %v33
    %v640 = vunpack.c.l.b16 %v34
    %v641 = vunpack.c.h.b16 %v34
    %v642 = vunpack.c.l.b16 %v35
    %v643 = vunpack.c.h.b16 %v35
    %v644 = vunpack.c.l.b16 %v36
    %v645 = vunpack.c.h.b16 %v36
    %v646 = vunpack.c.l.b16 %v37
    %v647 = vunpack.c.h.b16 %v37
    %v648 = vunpack.c.l.b16 %v38
    %v649 = vunpack.c.h.b16 %v38
    %v650 = vunpack.c.l.b16 %v39
    %v651 = vunpack.c.h.b16 %v39
    %v652 = vunpack.c.l.b16 %v40
    %v653 = vunpack.c.h.b16 %v40
    %v654 = vunpack.c.l.b16 %v41
    %v655 = vunpack.c.h.b16 %v41
    %v656 = vunpack.c.l.b16 %v42
    %v657 = vunpack.c.h.b16 %v42
    %v658 = vunpack.c.l.b16 %v43
    %v659 = vunpack.c.h.b16 %v43
    %v660 = vunpack.c.l.b16 %v44
    %v661 = vunpack.c.h.b16 %v44
    %v662 = vunpack.c.l.b16 %v45
    %v663 = vunpack.c.h.b16 %v45
    %v664 = vunpack.c.l.b16 %v46
    %v665 = vunpack.c.h.b16 %v46
    %v666 = vunpack.c.l.b16 %v47
    %v667 = vunpack.c.h.b16 %v47
    %v668 = vunpack.c.l.b16 %v48
    %v669 = vunpack.c.h.b16 %v48
    %v670 = vunpack.c.l.b16 %v49
    %v671 = vunpack.c.h.b16 %v49
    %v672 = vunpack.c.l.b16 %v50
    %v673 = vunpack.c.h.b16 %v50
    %v674 = vunpack.c.l.b16 %v51
    %v675 = vunpack.c.h.b16 %v51
    %v676 = vunpack.c.l.b16 %v52
    %v677 = vunpack.c.h.b16 %v52
    %v678 = vpack.c.b16 %v646, %v614
    %v679 = vpack.c.b16 %v647, %v615
    %v680 = vpack.c.b16 %v648, %v616
    %v681 = vpack.c.b16 %v649, %v617
    %v682 = vpack.c.b16 %v650, %v618
    %v683 = vpack.c.b16 %v651, %v619
    %v684 = vpack.c.b16 %v652, %v620
    %v685 = vpack.c.b16 %v653, %v621
    %v686 = vpack.c.b16 %v654, %v622
    %v687 = vpack.c.b16 %v655, %v623
    %v688 = vpack.c.b16 %v656, %v624
    %v689 = vpack.c.b16 %v657, %v625
    %v690 = vpack.c.b16 %v658, %v626
    %v691 = vpack.c.b16 %v659, %v627
    %v692 = vpack.c.b16 %v660, %v628
    %v693 = vpack.c.b16 %v661, %v629
    %v694 = vpack.c.b16 %v662, %v630
    %v695 = vpack.c.b16 %v663, %v631
    %v696 = vpack.c.b16 %v664, %v632
    %v697 = vpack.c.b16 %v665, %v633
    %v698 = vpack.c.b16 %v666, %v634
    %v699 = vpack.c.b16 %v667, %v635
    %v700 = vpack.c.b16 %v668, %v636
    %v701 = vpack.c.b16 %v669, %v637
    %v702 = vpack.c.b16 %v670, %v638
    %v703 = vpack.c.b16 %v671, %v639
    %v704 = vpack.c.b16 %v672, %v640
    %v705 = vpack.c.b16 %v673, %v641
    %v706 = vpack.c.b16 %v674, %v642
    %v707 = vpack.c.b16 %v675, %v643
    %v708 = vpack.c.b16 %v676, %v644
    %v709 = vpack.c.b16 %v677, %v645
    %v1254 = vunpack.c.l.b16 %v53
    %v1255 = vunpack.c.l.b16 %v54
    %v1256 = vunpack.c.l.b16 %v55
    %v1257 = vunpack.c.l.b16 %v56
    %v1258 = vunpack.c.l.b16 %v57
    %v1259 = vunpack.c.l.b16 %v58
    %v1260 = vunpack.c.l.b16 %v59
    %v1261 = vunpack.c.l.b16 %v60
    %v1262 = vunpack.c.l.b16 %v61
    %v1263 = vunpack.c.l.b16 %v62
    %v1264 = vunpack.c.l.b16 %v63
    %v1265 = vunpack.c.l.b16 %v64
    %v1266 = vunpack.c.l.b16 %v65
    %v1267 = vunpack.c.l.b16 %v66
    %v1268 = vunpack.c.l.b16 %v67
    %v1269 = vunpack.c.l.b16 %v68
    %v1270 = vunpack.c.l.b16 %v69
    %v1271 = vunpack.c.l.b16 %v70
    %v1272 = vunpack.c.l.b16 %v71
    %v1273 = vunpack.c.l.b16 %v72
    %v1274 = vunpack.c.l.b16 %v73
    %v1275 = vunpack.c.l.b16 %v74
    %v1276 = vunpack.c.l.b16 %v75
    %v1277 = vunpack.c.l.b16 %v76
    %v1278 = vunpack.c.l.b16 %v77
    %v1279 = vunpack.c.l.b16 %v78
    %v1280 = vunpack.c.l.b16 %v79
    %v1281 = vunpack.c.l.b16 %v80
    %v1282 = vunpack.c.l.b16 %v81
    %v1283 = vunpack.c.l.b16 %v82
    %v1284 = vunpack.c.l.b16 %v83
    %v1285 = vunpack.c.l.b16 %v84
    %v1286 = vunpack.c.l.b16 %v85
    %v1287 = vunpack.c.l.b16 %v86
    %v1288 = vunpack.c.l.b16 %v87
    %v1289 = vunpack.c.l.b16 %v88
    %v1290 = vunpack.c.l.b16 %v89
    %v1291 = vunpack.c.l.b16 %v90
    %v1292 = vunpack.c.l.b16 %v91
    %v1293 = vunpack.c.l.b16 %v92
    %v1294 = vunpack.c.l.b16 %v93
    %v1295 = vunpack.c.l.b16 %v94
    %v1296 = vunpack.c.l.b16 %v95
    %v1297 = vunpack.c.l.b16 %v96
    %v1298 = vunpack.c.l.b16 %v97
    %v1299 = vunpack.c.l.b16 %v98
    %v1300 = vunpack.c.l.b16 %v99
    %v1301 = vunpack.c.l.b16 %v100
    %v1302 = vunpack.c.l.b16 %v101
    %v1303 = vunpack.c.l.b16 %v102
    %v1304 = vunpack.c.l.b16 %v103
    %v1305 = vunpack.c.l.b16 %v104
    %v1306 = vunpack.c.l.b16 %v105
    %v1307 = vunpack.c.l.b16 %v106
    %v1308 = vunpack.c.l.b16 %v107
    %v1309 = vunpack.c.l.b16 %v108
    %v1310 = vunpack.c.l.b16 %v109
    %v1311 = vunpack.c.l.b16 %v110
    %v1312 = vunpack.c.l.b16 %v111
    %v1313 = vunpack.c.l.b16 %v112
    %v1314 = vunpack.c.l.b16 %v113
    %v1315 = vunpack.c.l.b16 %v114
    %v1316 = vunpack.c.l.b16 %v115
    %v1317 = vunpack.c.l.b16 %v116
    %v1318 = vunpack.c.l.b16 %v117
    %v1319 = vunpack.c.l.b16 %v118
    %v1320 = vunpack.c.l.b16 %v119
    %v1321 = vunpack.c.l.b16 %v120
    %v1322 = vunpack.c.l.b16 %v121
    %v1323 = vunpack.c.l.b16 %v122
    %v1324 = vunpack.c.l.b16 %v123
    %v1325 = vunpack.c.l.b16 %v124
    %v1326 = vunpack.c.l.b16 %v125
    %v1327 = vunpack.c.l.b16 %v126
    %v1328 = vunpack.c.l.b16 %v127
    %v1329 = vunpack.c.l.b16 %v128
    %v1330 = vunpack.c.l.b16 %v129
    %v1331 = vunpack.c.l.b16 %v130
    %v1332 = vunpack.c.l.b16 %v131
    %v1333 = vunpack.c.l.b16 %v132
    %v1334 = vunpack.c.l.b16 %v133
    %v1335 = vunpack.c.l.b16 %v134
    %v1336 = vunpack.c.l.b16 %v135
    %v1337 = vunpack.c.l.b16 %v136
    %v1338 = vunpack.c.l.b16 %v137
    %v1339 = vunpack.c.l.b16 %v138
    %v1340 = vunpack.c.l.b16 %v139
    %v1341 = vunpack.c.l.b16 %v140
    %v1342 = vunpack.c.l.b16 %v141
    %v1343 = vunpack.c.l.b16 %v142
    %v1344 = vunpack.c.l.b16 %v143
    %v1345 = vunpack.c.l.b16 %v144
    %v1346 = vunpack.c.l.b16 %v145
    %v1347 = vunpack.c.l.b16 %v146
    %v1348 = vunpack.c.l.b16 %v147
    %v1349 = vunpack.c.l.b16 %v148
    %v1350 = vunpack.c.l.b16 %v149
    %v1351 = vunpack.c.l.b16 %v150
    %v1352 = vunpack.c.l.b16 %v151
    %v1353 = vunpack.c.l.b16 %v152
    %v1354 = vunpack.c.l.b16 %v153
    %v1355 = vunpack.c.l.b16 %v154
    %v1356 = vunpack.c.l.b16 %v155
    %v1357 = vunpack.c.l.b16 %v156
    %v1358 = vunpack.c.l.b16 %v157
    %v1359 = vunpack.c.l.b16 %v158
    %v1360 = vunpack.c.l.b16 %v159
    %v1361 = vunpack.c.l.b16 %v160
    %v1362 = vunpack.c.l.b16 %v161
    %v1363 = vunpack.c.l.b16 %v162
    %v1364 = vunpack.c.l.b16 %v163
    %v1365 = vunpack.c.l.b16 %v164
    %v1366 = vunpack.c.l.b16 %v165
    %v1367 = vunpack.c.l.b16 %v166
    %v1368 = vunpack.c.l.b16 %v167
    %v1369 = vunpack.c.l.b16 %v168
    %v1370 = vunpack.c.l.b16 %v169
    %v1371 = vunpack.c.l.b16 %v170
    %v1372 = vunpack.c.l.b16 %v171
    %v1373 = vunpack.c.l.b16 %v172
    %v1374 = vunpack.c.l.b16 %v173
    %v1375 = vunpack.c.l.b16 %v174
    %v1376 = vunpack.c.l.b16 %v175
    %v1377 = vunpack.c.l.b16 %v176
    %v1378 = vunpack.c.l.b16 %v177
    %v1379 = vunpack.c.l.b16 %v178
    %v1380 = vunpack.c.l.b16 %v179
    %v1381 = vunpack.c.l.b16 %v180
    %v1382 = vunpack.c.l.b16 %v181
    %v1383 = vunpack.c.l.b16 %v182
    %v1384 = vunpack.c.l.b16 %v183
    %v1385 = vunpack.c.l.b16 %v184
    %v1386 = vunpack.c.l.b16 %v185
    %v1387 = vunpack.c.l.b16 %v186
    %v1388 = vunpack.c.l.b16 %v187
    %v1389 = vunpack.c.l.b16 %v188
    %v1390 = vunpack.c.l.b16 %v189
    %v1391 = vunpack.c.l.b16 %v190
    %v1392 = vunpack.c.l.b16 %v191
    %v1393 = vunpack.c.l.b16 %v192
    %v1394 = vunpack.c.l.b16 %v193
    %v1395 = vunpack.c.l.b16 %v194
    %v1396 = vunpack.c.l.b16 %v195
    %v1397 = vunpack.c.l.b16 %v196
    %v1398 = vunpack.c.l.b16 %v197
    %v1399 = vunpack.c.l.b16 %v198
    %v1400 = vunpack.c.l.b16 %v199
    %v1401 = vunpack.c.l.b16 %v200
    %v1402 = vunpack.c.l.b16 %v201
    %v1403 = vunpack.c.l.b16 %v202
    %v1404 = vunpack.c.l.b16 %v203
    %v1405 = vunpack.c.l.b16 %v204
    %v1406 = vunpack.c.l.b16 %v205
    %v1407 = vunpack.c.l.b16 %v206
    %v1408 = vunpack.c.l.b16 %v207
    %v1409 = vunpack.c.l.b16 %v208
    %v1410 = vunpack.c.l.b16 %v209
    %v1411 = vunpack.c.l.b16 %v210
    %v1412 = vunpack.c.l.b16 %v211
    %v1413 = vunpack.c.l.b16 %v212
    %v1414 = vunpack.c.l.b16 %v213
    %v1415 = vunpack.c.l.b16 %v214
    %v1416 = vunpack.c.l.b16 %v215
    %v1417 = vunpack.c.l.b16 %v216
    %v1418 = vunpack.c.l.b16 %v217
    %v1419 = vunpack.c.l.b16 %v218
    %v1420 = vunpack.c.l.b16 %v219
    %v1421 = vunpack.c.l.b16 %v220
    %v1422 = vunpack.c.l.b16 %v221
    %v1423 = vunpack.c.l.b16 %v222
    %v1424 = vunpack.c.l.b16 %v223
    %v1425 = vunpack.c.l.b16 %v224
    %v1426 = vunpack.c.l.b16 %v225
    %v1427 = vunpack.c.l.b16 %v226
    %v1428 = vunpack.c.l.b16 %v227
    %v1429 = vunpack.c.l.b16 %v228
    %v1430 = vunpack.c.l.b16 %v229
    %v1431 = vunpack.c.l.b16 %v230
    %v1432 = vunpack.c.l.b16 %v231
    %v1433 = vunpack.c.l.b16 %v232
    %v1434 = vunpack.c.l.b16 %v233
    %v1435 = vunpack.c.l.b16 %v234
    %v1436 = vunpack.c.l.b16 %v235
    %v1437 = vunpack.c.l.b16 %v236
    %v1438 = vunpack.c.l.b16 %v237
    %v1439 = vunpack.c.l.b16 %v238
    %v1440 = vunpack.c.l.b16 %v239
    %v1441 = vunpack.c.l.b16 %v240
    %v1442 = vunpack.c.l.b16 %v241
    %v1443 = vunpack.c.l.b16 %v242
    %v1444 = vunpack.c.l.b16 %v243
    %v1445 = vunpack.c.l.b16 %v244
    %v1446 = vunpack.c.l.b16 %v245
    %v1447 = vunpack.c.l.b16 %v246
    %v1448 = vunpack.c.l.b16 %v247
    %v1449 = vunpack.c.l.b16 %v248
    %v1450 = vunpack.c.l.b16 %v249
    %v1451 = vunpack.c.l.b16 %v250
    %v1452 = vunpack.c.l.b16 %v251
    %v1453 = vunpack.c.l.b16 %v252
    %v1454 = vunpack.c.l.b16 %v253
    %v1455 = vunpack.c.l.b16 %v254
    %v1456 = vunpack.c.l.b16 %v255
    %v1457 = vunpack.c.l.b16 %v256
    %v1458 = vunpack.c.l.b16 %v257
    %v1459 = vunpack.c.l.b16 %v258
    %v1460 = vunpack.c.l.b16 %v259
    %v1461 = vunpack.c.l.b16 %v260
    %v1462 = vunpack.c.l.b16 %v261
    %v1463 = vunpack.c.l.b16 %v262
    %v1464 = vunpack.c.l.b16 %v263
    %v1465 = vunpack.c.l.b16 %v264
    %v1466 = vunpack.c.l.b16 %v265
    %v1467 = vunpack.c.l.b16 %v266
    %v1468 = vunpack.c.l.b16 %v267
    %v1469 = vunpack.c.l.b16 %v268
    %v1470 = vunpack.c.l.b16 %v269
    %v1471 = vunpack.c.l.b16 %v270
    %v1472 = vunpack.c.l.b16 %v271
    %v1473 = vunpack.c.l.b16 %v272
    %v1474 = vunpack.c.l.b16 %v273
    %v1475 = vunpack.c.l.b16 %v274
    %v1476 = vunpack.c.l.b16 %v275
    %v1477 = vunpack.c.l.b16 %v276
    %v1478 = vunpack.c.l.b16 %v277
    %v1479 = vunpack.c.l.b16 %v278
    %v1480 = vunpack.c.l.b16 %v279
    %v1481 = vunpack.c.l.b16 %v280
    %v1482 = vunpack.c.l.b16 %v281
    %v1483 = vunpack.c.l.b16 %v282
    %v1484 = vunpack.c.l.b16 %v283
    %v1485 = vunpack.c.l.b16 %v284
    %v1486 = vunpack.c.l.b16 %v285
    %v1487 = vunpack.c.l.b16 %v286
    %v1488 = vunpack.c.l.b16 %v287
    %v1489 = vunpack.c.l.b16 %v288
    %v1490 = vunpack.c.l.b16 %v289
    %v1491 = vunpack.c.l.b16 %v290
    %v1492 = vunpack.c.l.b16 %v291
    %v1493 = vunpack.c.l.b16 %v292
    %v1494 = vunpack.c.l.b16 %v293
    %v1495 = vunpack.c.l.b16 %v294
    %v1496 = vunpack.c.l.b16 %v295
    %v1497 = vunpack.c.l.b16 %v296
    %v1498 = vunpack.c.l.b16 %v297
    %v1499 = vunpack.c.l.b16 %v298
    %v1500 = vunpack.c.l.b16 %v299
    %v1501 = vunpack.c.l.b16 %v300
    %v1502 = vunpack.c.l.b16 %v301
    %v1503 = vunpack.c.l.b16 %v302
    %v1504 = vunpack.c.l.b16 %v303
    %v1505 = vunpack.c.l.b16 %v304
    %v1506 = vunpack.c.l.b16 %v305
    %v1507 = vunpack.c.l.b16 %v306
    %v1508 = vunpack.c.l.b16 %v307
    %v1509 = vunpack.c.l.b16 %v308
    %v1510 = vunpack.c.l.b16 %v309
    %v1511 = vunpack.c.l.b16 %v310
    %v1512 = vunpack.c.l.b16 %v311
    %v1513 = vunpack.c.l.b16 %v312
    %v1514 = vunpack.c.l.b16 %v313
    %v1515 = vunpack.c.l.b16 %v314
    %v1516 = vunpack.c.l.b16 %v315
    %v1517 = vunpack.c.l.b16 %v316
    %v1518 = vunpack.c.l.b16 %v317
    %v1519 = vunpack.c.l.b16 %v318
    %v1520 = vunpack.c.l.b16 %v319
    %v1521 = vunpack.c.l.b16 %v320
    %v1522 = vunpack.c.l.b16 %v321
    %v1523 = vunpack.c.l.b16 %v322
    %v1524 = vunpack.c.l.b16 %v323
    %v1525 = vunpack.c.l.b16 %v324
    %v1526 = vunpack.c.l.b16 %v325
    %v1527 = vunpack.c.l.b16 %v326
    %v1528 = vunpack.c.l.b16 %v327
    %v1529 = vunpack.c.l.b16 %v328
    %v1530 = vunpack.c.l.b16 %v329
    %v1531 = vunpack.c.l.b16 %v330
    %v1532 = vunpack.c.l.b16 %v331
    %v1533 = vunpack.c.l.b16 %v332
    %v1534 = vunpack.c.l.b16 %v333
    %v1535 = vunpack.c.l.b16 %v334
    %v1536 = vunpack.c.l.b16 %v335
    %v1537 = vunpack.c.l.b16 %v336
    %v1538 = vunpack.c.l.b16 %v337
    %v1539 = vunpack.c.l.b16 %v338
    %v1540 = vunpack.c.l.b16 %v339
    %v1541 = vunpack.c.l.b16 %v340
    %v1542 = vunpack.c.l.b16 %v341
    %v1543 = vunpack.c.l.b16 %v342
    %v1544 = vunpack.c.l.b16 %v343
    %v1545 = vunpack.c.l.b16 %v344
    %v1546 = vunpack.c.l.b16 %v345
    %v1547 = vunpack.c.l.b16 %v346
    %v1548 = vunpack.c.l.b16 %v347
    %v1549 = vunpack.c.l.b16 %v348
    %v1550 = vunpack.c.l.b16 %v349
    %v1551 = vunpack.c.l.b16 %v350
    %v1552 = vunpack.c.l.b16 %v351
    %v1553 = vunpack.c.l.b16 %v352
    %v1554 = vunpack.c.l.b16 %v353
    %v1555 = vunpack.c.l.b16 %v354
    %v1556 = vunpack.c.l.b16 %v355
    %v1557 = vunpack.c.l.b16 %v356
    %v1558 = vunpack.c.l.b16 %v357
    %v1559 = vunpack.c.l.b16 %v358
    %v1560 = vunpack.c.l.b16 %v359
    %v1561 = vunpack.c.l.b16 %v360
    %v1562 = vunpack.c.l.b16 %v361
    %v1563 = vunpack.c.l.b16 %v362
    %v1564 = vunpack.c.l.b16 %v363
    %v1565 = vunpack.c.l.b16 %v364
    %v1566 = vunpack.c.l.b16 %v365
    %v1567 = vunpack.c.l.b16 %v366
    %v1568 = vunpack.c.l.b16 %v367
    %v1569 = vunpack.c.l.b16 %v368
    %v1570 = vunpack.c.l.b16 %v369
    %v1571 = vunpack.c.l.b16 %v370
    %v1572 = vunpack.c.l.b16 %v371
    %v1573 = vunpack.c.l.b16 %v372
    %v1574 = vunpack.c.l.b16 %v373
    %v1575 = vunpack.c.l.b16 %v374
    %v1576 = vunpack.c.l.b16 %v375
    %v1577 = vunpack.c.l.b16 %v376
    %v1578 = vunpack.c.l.b16 %v377
    %v1579 = vunpack.c.l.b16 %v378
    %v1580 = vunpack.c.l.b16 %v379
    %v1581 = vunpack.c.l.b16 %v380
    %v1582 = vunpack.c.l.b16 %v381
    %v1583 = vunpack.c.l.b16 %v382
    %v1584 = vunpack.c.l.b16 %v383
    %v1585 = vunpack.c.l.b16 %v384
    %v1586 = vunpack.c.l.b16 %v385
    %v1587 = vunpack.c.l.b16 %v386
    %v1588 = vunpack.c.l.b16 %v387
    %v1589 = vunpack.c.l.b16 %v388
    %v1590 = vunpack.c.l.b16 %v389
    %v1591 = vunpack.c.l.b16 %v390
    %v1592 = vunpack.c.l.b16 %v391
    %v1593 = vunpack.c.l.b16 %v392
    %v1594 = vunpack.c.l.b16 %v393
    %v1595 = vunpack.c.l.b16 %v394
    %v1596 = vunpack.c.l.b16 %v395
    %v1597 = vunpack.c.l.b16 %v396
    %v1598 = vunpack.c.l.b16 %v397
    %v1599 = vunpack.c.l.b16 %v398
    %v1600 = vunpack.c.l.b16 %v399
    %v1601 = vunpack.c.l.b16 %v400
    %v1602 = vunpack.c.l.b16 %v401
    %v1603 = vunpack.c.l.b16 %v402
    %v1604 = vunpack.c.l.b16 %v403
    %v1605 = vunpack.c.l.b16 %v404
    %v1606 = vunpack.c.l.b16 %v405
    %v1607 = vunpack.c.l.b16 %v406
    %v1608 = vunpack.c.l.b16 %v407
    %v1609 = vunpack.c.l.b16 %v408
    %v1610 = vunpack.c.l.b16 %v409
    %v1611 = vunpack.c.l.b16 %v410
    %v1612 = vunpack.c.l.b16 %v411
    %v1613 = vunpack.c.l.b16 %v412
    %v1614 = vunpack.c.l.b16 %v413
    %v1615 = vunpack.c.l.b16 %v414
    %v1616 = vunpack.c.l.b16 %v415
    %v1617 = vunpack.c.l.b16 %v416
    %v1618 = vunpack.c.l.b16 %v417
    %v1619 = vunpack.c.l.b16 %v418
    %v1620 = vunpack.c.l.b16 %v419
    %v1621 = vunpack.c.l.b16 %v420
    %v1622 = vunpack.c.l.b16 %v421
    %v1623 = vunpack.c.l.b16 %v422
    %v1624 = vunpack.c.l.b16 %v423
    %v1625 = vunpack.c.l.b16 %v424
    %v1626 = vunpack.c.l.b16 %v425
    %v1627 = vunpack.c.l.b16 %v426
    %v1628 = vunpack.c.l.b16 %v427
    %v1629 = vunpack.c.l.b16 %v428
    %v1630 = vunpack.c.l.b16 %v429
    %v1631 = vunpack.c.l.b16 %v430
    %v1632 = vunpack.c.l.b16 %v431
    %v1633 = vunpack.c.l.b16 %v432
    %v1634 = vunpack.c.l.b16 %v433
    %v1635 = vunpack.c.l.b16 %v434
    %v1636 = vunpack.c.l.b16 %v435
    %v1637 = vunpack.c.l.b16 %v436
    %v1638 = vunpack.c.l.b16 %v437
    %v1639 = vunpack.c.l.b16 %v438
    %v1640 = vunpack.c.l.b16 %v439
    %v1641 = vunpack.c.l.b16 %v440
    %v1642 = vunpack.c.l.b16 %v441
    %v1643 = vunpack.c.l.b16 %v442
    %v1644 = vunpack.c.l.b16 %v443
    %v1645 = vunpack.c.l.b16 %v444
    %v1646 = vunpack.c.l.b16 %v445
    %v1647 = vunpack.c.l.b16 %v446
    %v1648 = vunpack.c.l.b16 %v447
    %v1649 = vunpack.c.l.b16 %v448
    %v1650 = vunpack.c.l.b16 %v449
    %v1651 = vunpack.c.l.b16 %v450
    %v1652 = vunpack.c.l.b16 %v451
    %v1653 = vunpack.c.l.b16 %v452
    %v1654 = vunpack.c.l.b16 %v453
    %v1655 = vunpack.c.l.b16 %v454
    %v1656 = vunpack.c.l.b16 %v455
    %v1657 = vunpack.c.l.b16 %v456
    %v1658 = vunpack.c.l.b16 %v457
    %v1659 = vunpack.c.l.b16 %v458
    %v1660 = vunpack.c.l.b16 %v459
    %v1661 = vunpack.c.l.b16 %v460
    %v1662 = vunpack.c.l.b16 %v461
    %v1663 = vunpack.c.l.b16 %v462
    %v1664 = vunpack.c.l.b16 %v463
    %v1665 = vunpack.c.l.b16 %v464
    %v1666 = vunpack.c.l.b16 %v465
    %v1667 = vunpack.c.l.b16 %v466
    %v1668 = vunpack.c.l.b16 %v467
    %v1669 = vunpack.c.l.b16 %v468
    %v1670 = vunpack.c.l.b16 %v469
    %v1671 = vunpack.c.l.b16 %v470
    %v1672 = vunpack.c.l.b16 %v471
    %v1673 = vunpack.c.l.b16 %v472
    %v1674 = vunpack.c.l.b16 %v473
    %v1675 = vunpack.c.l.b16 %v474
    %v1676 = vunpack.c.l.b16 %v475
    %v1677 = vunpack.c.l.b16 %v476
    %v1678 = vunpack.c.l.b16 %v477
    %v1679 = vunpack.c.l.b16 %v478
    %v1680 = vunpack.c.l.b16 %v479
    %v1681 = vunpack.c.l.b16 %v480
    %v1682 = vunpack.c.l.b16 %v481
    %v1683 = vunpack.c.l.b16 %v482
    %v1684 = vunpack.c.l.b16 %v483
    %v1685 = vunpack.c.l.b16 %v484
    %v1686 = vunpack.c.l.b16 %v485
    %v1687 = vunpack.c.l.b16 %v486
    %v1688 = vunpack.c.l.b16 %v487
    %v1689 = vunpack.c.l.b16 %v488
    %v1690 = vunpack.c.l.b16 %v489
    %v1691 = vunpack.c.l.b16 %v490
    %v1692 = vunpack.c.l.b16 %v491
    %v1693 = vunpack.c.l.b16 %v492
    %v1694 = vunpack.c.l.b16 %v493
    %v1695 = vunpack.c.l.b16 %v494
    %v1696 = vunpack.c.l.b16 %v495
    %v1697 = vunpack.c.l.b16 %v496
    %v1698 = vunpack.c.l.b16 %v497
    %v1699 = vunpack.c.l.b16 %v498
    %v1700 = vunpack.c.l.b16 %v499
    %v1701 = vunpack.c.l.b16 %v500
    %v1702 = vunpack.c.l.b16 %v501
    %v1703 = vunpack.c.l.b16 %v502
    %v1704 = vunpack.c.l.b16 %v503
    %v1705 = vunpack.c.l.b16 %v504
    %v1706 = vunpack.c.l.b16 %v505
    %v1707 = vunpack.c.l.b16 %v506
    %v1708 = vunpack.c.l.b16 %v507
    %v1709 = vunpack.c.l.b16 %v508
    %v1710 = vunpack.c.l.b16 %v509
    %v1711 = vunpack.c.l.b16 %v510
    %v1712 = vunpack.c.l.b16 %v511
    %v1713 = vunpack.c.l.b16 %v512
    %v1714 = vunpack.c.l.b16 %v513
    %v1715 = vunpack.c.l.b16 %v514
    %v1716 = vunpack.c.l.b16 %v515
    %v1717 = vunpack.c.l.b16 %v516
    %v1718 = vunpack.c.l.b16 %v517
    %v1719 = vunpack.c.l.b16 %v518
    %v1720 = vunpack.c.l.b16 %v519
    %v1721 = vunpack.c.l.b16 %v520
    %v1722 = vunpack.c.l.b16 %v521
    %v1723 = vunpack.c.l.b16 %v522
    %v1724 = vunpack.c.l.b16 %v523
    %v1725 = vunpack.c.l.b16 %v524
    %v1726 = vunpack.c.l.b16 %v525
    %v1727 = vunpack.c.l.b16 %v526
    %v1728 = vunpack.c.l.b16 %v527
    %v1729 = vunpack.c.l.b16 %v528
    %v1730 = vunpack.c.l.b16 %v529
    %v1731 = vunpack.c.l.b16 %v530
    %v1732 = vunpack.c.l.b16 %v531
    %v1733 = vunpack.c.l.b16 %v532
    %v1734 = vunpack.c.l.b16 %v533
    %v1735 = vunpack.c.l.b16 %v534
    %v1736 = vunpack.c.l.b16 %v535
    %v1737 = vunpack.c.l.b16 %v536
    %v1738 = vunpack.c.l.b16 %v537
    %v1739 = vunpack.c.l.b16 %v538
    %v1740 = vunpack.c.l.b16 %v539
    %v1741 = vunpack.c.l.b16 %v540
    %v1742 = vunpack.c.l.b16 %v541
    %v1743 = vunpack.c.l.b16 %v542
    %v1744 = vunpack.c.l.b16 %v543
    %v1745 = vunpack.c.l.b16 %v544
    %v1746 = vunpack.c.l.b16 %v545
    %v1747 = vunpack.c.l.b16 %v546
    %v1748 = vunpack.c.l.b16 %v547
    %v1749 = vunpack.c.l.b16 %v548
    %v1750 = vunpack.c.l.b16 %v549
    %v1751 = vunpack.c.l.b16 %v550
    %v1752 = vunpack.c.l.b16 %v551
    %v1753 = vunpack.c.l.b16 %v552
    %v1754 = vunpack.c.l.b16 %v553
    %v1755 = vunpack.c.l.b16 %v554
    %v1756 = vunpack.c.l.b16 %v555
    %v1757 = vunpack.c.l.b16 %v556
    %v1758 = vunpack.c.l.b16 %v557
    %v1759 = vunpack.c.l.b16 %v558
    %v1760 = vunpack.c.l.b16 %v559
    %v1761 = vunpack.c.l.b16 %v560
    %v1762 = vunpack.c.l.b16 %v561
    %v1763 = vunpack.c.l.b16 %v562
    %v1764 = vunpack.c.l.b16 %v563
    %v1765 = vunpack.c.l.b16 %v564
    %v1766 = vpack.c.b16 %v1255, %v1254
    %v1767 = vpack.c.b16 %v1257, %v1256
    %v1768 = vpack.c.b16 %v1259, %v1258
    %v1769 = vpack.c.b16 %v1261, %v1260
    %v1770 = vpack.c.b16 %v1263, %v1262
    %v1771 = vpack.c.b16 %v1265, %v1264
    %v1772 = vpack.c.b16 %v1267, %v1266
    %v1773 = vpack.c.b16 %v1269, %v1268
    %v1774 = vpack.c.b16 %v1271, %v1270
    %v1775 = vpack.c.b16 %v1273, %v1272
    %v1776 = vpack.c.b16 %v1275, %v1274
    %v1777 = vpack.c.b16 %v1277, %v1276
    %v1778 = vpack.c.b16 %v1279, %v1278
    %v1779 = vpack.c.b16 %v1281, %v1280
    %v1780 = vpack.c.b16 %v1283, %v1282
    %v1781 = vpack.c.b16 %v1285, %v1284
    %v1782 = vpack.c.b16 %v1287, %v1286
    %v1783 = vpack.c.b16 %v1289, %v1288
    %v1784 = vpack.c.b16 %v1291, %v1290
    %v1785 = vpack.c.b16 %v1293, %v1292
    %v1786 = vpack.c.b16 %v1295, %v1294
    %v1787 = vpack.c.b16 %v1297, %v1296
    %v1788 = vpack.c.b16 %v1299, %v1298
    %v1789 = vpack.c.b16 %v1301, %v1300
    %v1790 = vpack.c.b16 %v1303, %v1302
    %v1791 = vpack.c.b16 %v1305, %v1304
    %v1792 = vpack.c.b16 %v1307, %v1306
    %v1793 = vpack.c.b16 %v1309, %v1308
    %v1794 = vpack.c.b16 %v1311, %v1310
    %v1795 = vpack.c.b16 %v1313, %v1312
    %v1796 = vpack.c.b16 %v1315, %v1314
    %v1797 = vpack.c.b16 %v1317, %v1316
    %v1798 = vpack.c.b16 %v1319, %v1318
    %v1799 = vpack.c.b16 %v1321, %v1320
    %v1800 = vpack.c.b16 %v1323, %v1322
    %v1801 = vpack.c.b16 %v1325, %v1324
    %v1802 = vpack.c.b16 %v1327, %v1326
    %v1803 = vpack.c.b16 %v1329, %v1328
    %v1804 = vpack.c.b16 %v1331, %v1330
    %v1805 = vpack.c.b16 %v1333, %v1332
    %v1806 = vpack.c.b16 %v1335, %v1334
    %v1807 = vpack.c.b16 %v1337, %v1336
    %v1808 = vpack.c.b16 %v1339, %v1338
    %v1809 = vpack.c.b16 %v1341, %v1340
    %v1810 = vpack.c.b16 %v1343, %v1342
    %v1811 = vpack.c.b16 %v1345, %v1344
    %v1812 = vpack.c.b16 %v1347, %v1346
    %v1813 = vpack.c.b16 %v1349, %v1348
    %v1814 = vpack.c.b16 %v1351, %v1350
    %v1815 = vpack.c.b16 %v1353, %v1352
    %v1816 = vpack.c.b16 %v1355, %v1354
    %v1817 = vpack.c.b16 %v1357, %v1356
    %v1818 = vpack.c.b16 %v1359, %v1358
    %v1819 = vpack.c.b16 %v1361, %v1360
    %v1820 = vpack.c.b16 %v1363, %v1362
    %v1821 = vpack.c.b16 %v1365, %v1364
    %v1822 = vpack.c.b16 %v1367, %v1366
    %v1823 = vpack.c.b16 %v1369, %v1368
    %v1824 = vpack.c.b16 %v1371, %v1370
    %v1825 = vpack.c.b16 %v1373, %v1372
    %v1826 = vpack.c.b16 %v1375, %v1374
    %v1827 = vpack.c.b16 %v1377, %v1376
    %v1828 = vpack.c.b16 %v1379, %v1378
    %v1829 = vpack.c.b16 %v1381, %v1380
    %v1830 = vpack.c.b16 %v1383, %v1382
    %v1831 = vpack.c.b16 %v1385, %v1384
    %v1832 = vpack.c.b16 %v1387, %v1386
    %v1833 = vpack.c.b16 %v1389, %v1388
    %v1834 = vpack.c.b16 %v1391, %v1390
    %v1835 = vpack.c.b16 %v1393, %v1392
    %v1836 = vpack.c.b16 %v1395, %v1394
    %v1837 = vpack.c.b16 %v1397, %v1396
    %v1838 = vpack.c.b16 %v1399, %v1398
    %v1839 = vpack.c.b16 %v1401, %v1400
    %v1840 = vpack.c.b16 %v1403, %v1402
    %v1841 = vpack.c.b16 %v1405, %v1404
    %v1842 = vpack.c.b16 %v1407, %v1406
    %v1843 = vpack.c.b16 %v1409, %v1408
    %v1844 = vpack.c.b16 %v1411, %v1410
    %v1845 = vpack.c.b16 %v1413, %v1412
    %v1846 = vpack.c.b16 %v1415, %v1414
    %v1847 = vpack.c.b16 %v1417, %v1416
    %v1848 = vpack.c.b16 %v1419, %v1418
    %v1849 = vpack.c.b16 %v1421, %v1420
    %v1850 = vpack.c.b16 %v1423, %v1422
    %v1851 = vpack.c.b16 %v1425, %v1424
    %v1852 = vpack.c.b16 %v1427, %v1426
    %v1853 = vpack.c.b16 %v1429, %v1428
    %v1854 = vpack.c.b16 %v1431, %v1430
    %v1855 = vpack.c.b16 %v1433, %v1432
    %v1856 = vpack.c.b16 %v1435, %v1434
    %v1857 = vpack.c.b16 %v1437, %v1436
    %v1858 = vpack.c.b16 %v1439, %v1438
    %v1859 = vpack.c.b16 %v1441, %v1440
    %v1860 = vpack.c.b16 %v1443, %v1442
    %v1861 = vpack.c.b16 %v1445, %v1444
    %v1862 = vpack.c.b16 %v1447, %v1446
    %v1863 = vpack.c.b16 %v1449, %v1448
    %v1864 = vpack.c.b16 %v1451, %v1450
    %v1865 = vpack.c.b16 %v1453, %v1452
    %v1866 = vpack.c.b16 %v1455, %v1454
    %v1867 = vpack.c.b16 %v1457, %v1456
    %v1868 = vpack.c.b16 %v1459, %v1458
    %v1869 = vpack.c.b16 %v1461, %v1460
    %v1870 = vpack.c.b16 %v1463, %v1462
    %v1871 = vpack.c.b16 %v1465, %v1464
    %v1872 = vpack.c.b16 %v1467, %v1466
    %v1873 = vpack.c.b16 %v1469, %v1468
    %v1874 = vpack.c.b16 %v1471, %v1470
    %v1875 = vpack.c.b16 %v1473, %v1472
    %v1876 = vpack.c.b16 %v1475, %v1474
    %v1877 = vpack.c.b16 %v1477, %v1476
    %v1878 = vpack.c.b16 %v1479, %v1478
    %v1879 = vpack.c.b16 %v1481, %v1480
    %v1880 = vpack.c.b16 %v1483, %v1482
    %v1881 = vpack.c.b16 %v1485, %v1484
    %v1882 = vpack.c.b16 %v1487, %v1486
    %v1883 = vpack.c.b16 %v1489, %v1488
    %v1884 = vpack.c.b16 %v1491, %v1490
    %v1885 = vpack.c.b16 %v1493, %v1492
    %v1886 = vpack.c.b16 %v1495, %v1494
    %v1887 = vpack.c.b16 %v1497, %v1496
    %v1888 = vpack.c.b16 %v1499, %v1498
    %v1889 = vpack.c.b16 %v1501, %v1500
    %v1890 = vpack.c.b16 %v1503, %v1502
    %v1891 = vpack.c.b16 %v1505, %v1504
    %v1892 = vpack.c.b16 %v1507, %v1506
    %v1893 = vpack.c.b16 %v1509, %v1508
    %v1894 = vpack.c.b16 %v1511, %v1510
    %v1895 = vpack.c.b16 %v1513, %v1512
    %v1896 = vpack.c.b16 %v1515, %v1514
    %v1897 = vpack.c.b16 %v1517, %v1516
    %v1898 = vpack.c.b16 %v1519, %v1518
    %v1899 = vpack.c.b16 %v1521, %v1520
    %v1900 = vpack.c.b16 %v1523, %v1522
    %v1901 = vpack.c.b16 %v1525, %v1524
    %v1902 = vpack.c.b16 %v1527, %v1526
    %v1903 = vpack.c.b16 %v1529, %v1528
    %v1904 = vpack.c.b16 %v1531, %v1530
    %v1905 = vpack.c.b16 %v1533, %v1532
    %v1906 = vpack.c.b16 %v1535, %v1534
    %v1907 = vpack.c.b16 %v1537, %v1536
    %v1908 = vpack.c.b16 %v1539, %v1538
    %v1909 = vpack.c.b16 %v1541, %v1540
    %v1910 = vpack.c.b16 %v1543, %v1542
    %v1911 = vpack.c.b16 %v1545, %v1544
    %v1912 = vpack.c.b16 %v1547, %v1546
    %v1913 = vpack.c.b16 %v1549, %v1548
    %v1914 = vpack.c.b16 %v1551, %v1550
    %v1915 = vpack.c.b16 %v1553, %v1552
    %v1916 = vpack.c.b16 %v1555, %v1554
    %v1917 = vpack.c.b16 %v1557, %v1556
    %v1918 = vpack.c.b16 %v1559, %v1558
    %v1919 = vpack.c.b16 %v1561, %v1560
    %v1920 = vpack.c.b16 %v1563, %v1562
    %v1921 = vpack.c.b16 %v1565, %v1564
    %v1922 = vpack.c.b16 %v1567, %v1566
    %v1923 = vpack.c.b16 %v1569, %v1568
    %v1924 = vpack.c.b16 %v1571, %v1570
    %v1925 = vpack.c.b16 %v1573, %v1572
    %v1926 = vpack.c.b16 %v1575, %v1574
    %v1927 = vpack.c.b16 %v1577, %v1576
    %v1928 = vpack.c.b16 %v1579, %v1578
    %v1929 = vpack.c.b16 %v1581, %v1580
    %v1930 = vpack.c.b16 %v1583, %v1582
    %v1931 = vpack.c.b16 %v1585, %v1584
    %v1932 = vpack.c.b16 %v1587, %v1586
    %v1933 = vpack.c.b16 %v1589, %v1588
    %v1934 = vpack.c.b16 %v1591, %v1590
    %v1935 = vpack.c.b16 %v1593, %v1592
    %v1936 = vpack.c.b16 %v1595, %v1594
    %v1937 = vpack.c.b16 %v1597, %v1596
    %v1938 = vpack.c.b16 %v1599, %v1598
    %v1939 = vpack.c.b16 %v1601, %v1600
    %v1940 = vpack.c.b16 %v1603, %v1602
    %v1941 = vpack.c.b16 %v1605, %v1604
    %v1942 = vpack.c.b16 %v1607, %v1606
    %v1943 = vpack.c.b16 %v1609, %v1608
    %v1944 = vpack.c.b16 %v1611, %v1610
    %v1945 = vpack.c.b16 %v1613, %v1612
    %v1946 = vpack.c.b16 %v1615, %v1614
    %v1947 = vpack.c.b16 %v1617, %v1616
    %v1948 = vpack.c.b16 %v1619, %v1618
    %v1949 = vpack.c.b16 %v1621, %v1620
    %v1950 = vpack.c.b16 %v1623, %v1622
    %v1951 = vpack.c.b16 %v1625, %v1624
    %v1952 = vpack.c.b16 %v1627, %v1626
    %v1953 = vpack.c.b16 %v1629, %v1628
    %v1954 = vpack.c.b16 %v1631, %v1630
    %v1955 = vpack.c.b16 %v1633, %v1632
    %v1956 = vpack.c.b16 %v1635, %v1634
    %v1957 = vpack.c.b16 %v1637, %v1636
    %v1958 = vpack.c.b16 %v1639, %v1638
    %v1959 = vpack.c.b16 %v1641, %v1640
    %v1960 = vpack.c.b16 %v1643, %v1642
    %v1961 = vpack.c.b16 %v1645, %v1644
    %v1962 = vpack.c.b16 %v1647, %v1646
    %v1963 = vpack.c.b16 %v1649, %v1648
    %v1964 = vpack.c.b16 %v1651, %v1650
    %v1965 = vpack.c.b16 %v1653, %v1652
    %v1966 = vpack.c.b16 %v1655, %v1654
    %v1967 = vpack.c.b16 %v1657, %v1656
    %v1968 = vpack.c.b16 %v1659, %v1658
    %v1969 = vpack.c.b16 %v1661, %v1660
    %v1970 = vpack.c.b16 %v1663, %v1662
    %v1971 = vpack.c.b16 %v1665, %v1664
    %v1972 = vpack.c.b16 %v1667, %v1666
    %v1973 = vpack.c.b16 %v1669, %v1668
    %v1974 = vpack.c.b16 %v1671, %v1670
    %v1975 = vpack.c.b16 %v1673, %v1672
    %v1976 = vpack.c.b16 %v1675, %v1674
    %v1977 = vpack.c.b16 %v1677, %v1676
    %v1978 = vpack.c.b16 %v1679, %v1678
    %v1979 = vpack.c.b16 %v1681, %v1680
    %v1980 = vpack.c.b16 %v1683, %v1682
    %v1981 = vpack.c.b16 %v1685, %v1684
    %v1982 = vpack.c.b16 %v1687, %v1686
    %v1983 = vpack.c.b16 %v1689, %v1688
    %v1984 = vpack.c.b16 %v1691, %v1690
    %v1985 = vpack.c.b16 %v1693, %v1692
    %v1986 = vpack.c.b16 %v1695, %v1694
    %v1987 = vpack.c.b16 %v1697, %v1696
    %v1988 = vpack.c.b16 %v1699, %v1698
    %v1989 = vpack.c.b16 %v1701, %v1700
    %v1990 = vpack.c.b16 %v1703, %v1702
    %v1991 = vpack.c.b16 %v1705, %v1704
    %v1992 = vpack.c.b16 %v1707, %v1706
    %v1993 = vpack.c.b16 %v1709, %v1708
    %v1994 = vpack.c.b16 %v1711, %v1710
    %v1995 = vpack.c.b16 %v1713, %v1712
    %v1996 = vpack.c.b16 %v1715, %v1714
    %v1997 = vpack.c.b16 %v1717, %v1716
    %v1998 = vpack.c.b16 %v1719, %v1718
    %v1999 = vpack.c.b16 %v1721, %v1720
    %v2000 = vpack.c.b16 %v1723, %v1722
    %v2001 = vpack.c.b16 %v1725, %v1724
    %v2002 = vpack.c.b16 %v1727, %v1726
    %v2003 = vpack.c.b16 %v1729, %v1728
    %v2004 = vpack.c.b16 %v1731, %v1730
    %v2005 = vpack.c.b16 %v1733, %v1732
    %v2006 = vpack.c.b16 %v1735, %v1734
    %v2007 = vpack.c.b16 %v1737, %v1736
    %v2008 = vpack.c.b16 %v1739, %v1738
    %v2009 = vpack.c.b16 %v1741, %v1740
    %v2010 = vpack.c.b16 %v1743, %v1742
    %v2011 = vpack.c.b16 %v1745, %v1744
    %v2012 = vpack.c.b16 %v1747, %v1746
    %v2013 = vpack.c.b16 %v1749, %v1748
    %v2014 = vpack.c.b16 %v1751, %v1750
    %v2015 = vpack.c.b16 %v1753, %v1752
    %v2016 = vpack.c.b16 %v1755, %v1754
    %v2017 = vpack.c.b16 %v1757, %v1756
    %v2018 = vpack.c.b16 %v1759, %v1758
    %v2019 = vpack.c.b16 %v1761, %v1760
    %v2020 = vpack.c.b16 %v1763, %v1762
    %v2021 = vpack.c.b16 %v1765, %v1764
    %2278 = vmatprep.subr.bf16.mxu0 0
    %2279 = vmatpush1.bf16.msra.mxu0 %v1773
    %2280 = vmatprep.subr.bf16.mxu0 0
    %2281 = vmatpush1.bf16.msra.mxu0 %v1772
    %2282 = vmatprep.subr.bf16.mxu0 0
    %2283 = vmatpush1.bf16.msra.mxu0 %v1771
    %2284 = vmatprep.subr.bf16.mxu0 0
    %2285 = vmatpush1.bf16.msra.mxu0 %v1770
    %2286 = vmatprep.subr.bf16.mxu0 0
    %2287 = vmatpush1.bf16.msra.mxu0 %v1769
    %2288 = vmatprep.subr.bf16.mxu0 0
    %2289 = vmatpush1.bf16.msra.mxu0 %v1768
    %2290 = vmatprep.subr.bf16.mxu0 0
    %2291 = vmatpush1.bf16.msra.mxu0 %v1767
    %2292 = vmatprep.subr.bf16.mxu0 0
    %2293 = vmatpush1.bf16.msra.mxu0 %v1766
    %2294 = vmatprep.subr.bf16.mxu0 0
    %2295 = vmatpush2.bf16.msra.mxu0 %v1781
    %2296 = vmatprep.subr.bf16.mxu0 0
    %2297 = vmatpush2.bf16.msra.mxu0 %v1780
    %2298 = vmatprep.subr.bf16.mxu0 0
    %2299 = vmatpush2.bf16.msra.mxu0 %v1779
    %2300 = vmatprep.subr.bf16.mxu0 0
    %2301 = vmatpush2.bf16.msra.mxu0 %v1778
    %2302 = vmatprep.subr.bf16.mxu0 0
    %2303 = vmatpush2.bf16.msra.mxu0 %v1777
    %2304 = vmatprep.subr.bf16.mxu0 0
    %2305 = vmatpush2.bf16.msra.mxu0 %v1776
    %2306 = vmatprep.subr.bf16.mxu0 0
    %2307 = vmatpush2.bf16.msra.mxu0 %v1775
    %2308 = vmatprep.subr.bf16.mxu0 0
    %2309 = vmatpush2.bf16.msra.mxu0 %v1774
    %2310 = vmatprep.mubr.bf16.mxu0 %v679
    %2311 = vmatmul.mubr.bf16.gmra.mxu0 %v678
    %v2312 = vpop.f32.mrf.mxu0
    %v2313 = vadd.f32 %v580, %v2312
    %v2314 = vpop.f32.mrf.mxu0
    %v2315 = vpop.f32.mrf.mxu0
    %v2316 = vadd.f32 %v581, %v2315
    %v2317 = vpop.f32.mrf.mxu0
    %2318 = vdwg.mxu0
    %2319 = vmatprep.subr.bf16.mxu0 0
    %2320 = vmatpush1.bf16.msra.mxu0 %v1789
    %2321 = vmatprep.subr.bf16.mxu0 0
    %2322 = vmatpush1.bf16.msra.mxu0 %v1788
    %2323 = vmatprep.subr.bf16.mxu0 0
    %2324 = vmatpush1.bf16.msra.mxu0 %v1787
    %2325 = vmatprep.subr.bf16.mxu0 0
    %2326 = vmatpush1.bf16.msra.mxu0 %v1786
    %2327 = vmatprep.subr.bf16.mxu0 0
    %2328 = vmatpush1.bf16.msra.mxu0 %v1785
    %2329 = vmatprep.subr.bf16.mxu0 0
    %2330 = vmatpush1.bf16.msra.mxu0 %v1784
    %2331 = vmatprep.subr.bf16.mxu0 0
    %2332 = vmatpush1.bf16.msra.mxu0 %v1783
    %2333 = vmatprep.subr.bf16.mxu0 0
    %2334 = vmatpush1.bf16.msra.mxu0 %v1782
    %2335 = vmatprep.subr.bf16.mxu0 0
    %2336 = vmatpush2.bf16.msra.mxu0 %v1797
    %2337 = vmatprep.subr.bf16.mxu0 0
    %2338 = vmatpush2.bf16.msra.mxu0 %v1796
    %2339 = vmatprep.subr.bf16.mxu0 0
    %2340 = vmatpush2.bf16.msra.mxu0 %v1795
    %2341 = vmatprep.subr.bf16.mxu0 0
    %2342 = vmatpush2.bf16.msra.mxu0 %v1794
    %2343 = vmatprep.subr.bf16.mxu0 0
    %2344 = vmatpush2.bf16.msra.mxu0 %v1793
    %2345 = vmatprep.subr.bf16.mxu0 0
    %2346 = vmatpush2.bf16.msra.mxu0 %v1792
    %2347 = vmatprep.subr.bf16.mxu0 0
    %2348 = vmatpush2.bf16.msra.mxu0 %v1791
    %2349 = vmatprep.subr.bf16.mxu0 0
    %2350 = vmatpush2.bf16.msra.mxu0 %v1790
    %2351 = vmatprep.mubr.bf16.mxu0 %v681
    %2352 = vmatmul.mubr.bf16.gmra.mxu0 %v680
    %v2353 = vpop.f32.mrf.mxu0
    %v2354 = vadd.f32 %v2313, %v2353
    %v2355 = vpop.f32.mrf.mxu0
    %v2356 = vpop.f32.mrf.mxu0
    %v2357 = vadd.f32 %v2316, %v2356
    %v2358 = vpop.f32.mrf.mxu0
    %2359 = vdwg.mxu0
    %2360 = vmatprep.subr.bf16.mxu0 0
    %2361 = vmatpush1.bf16.msra.mxu0 %v1805
    %2362 = vmatprep.subr.bf16.mxu0 0
    %2363 = vmatpush1.bf16.msra.mxu0 %v1804
    %2364 = vmatprep.subr.bf16.mxu0 0
    %2365 = vmatpush1.bf16.msra.mxu0 %v1803
    %2366 = vmatprep.subr.bf16.mxu0 0
    %2367 = vmatpush1.bf16.msra.mxu0 %v1802
    %2368 = vmatprep.subr.bf16.mxu0 0
    %2369 = vmatpush1.bf16.msra.mxu0 %v1801
    %2370 = vmatprep.subr.bf16.mxu0 0
    %2371 = vmatpush1.bf16.msra.mxu0 %v1800
    %2372 = vmatprep.subr.bf16.mxu0 0
    %2373 = vmatpush1.bf16.msra.mxu0 %v1799
    %2374 = vmatprep.subr.bf16.mxu0 0
    %2375 = vmatpush1.bf16.msra.mxu0 %v1798
    %2376 = vmatprep.subr.bf16.mxu0 0
    %2377 = vmatpush2.bf16.msra.mxu0 %v1813
    %2378 = vmatprep.subr.bf16.mxu0 0
    %2379 = vmatpush2.bf16.msra.mxu0 %v1812
    %2380 = vmatprep.subr.bf16.mxu0 0
    %2381 = vmatpush2.bf16.msra.mxu0 %v1811
    %2382 = vmatprep.subr.bf16.mxu0 0
    %2383 = vmatpush2.bf16.msra.mxu0 %v1810
    %2384 = vmatprep.subr.bf16.mxu0 0
    %2385 = vmatpush2.bf16.msra.mxu0 %v1809
    %2386 = vmatprep.subr.bf16.mxu0 0
    %2387 = vmatpush2.bf16.msra.mxu0 %v1808
    %2388 = vmatprep.subr.bf16.mxu0 0
    %2389 = vmatpush2.bf16.msra.mxu0 %v1807
    %2390 = vmatprep.subr.bf16.mxu0 0
    %2391 = vmatpush2.bf16.msra.mxu0 %v1806
    %2392 = vmatprep.mubr.bf16.mxu0 %v683
    %2393 = vmatmul.mubr.bf16.gmra.mxu0 %v682
    %v2394 = vpop.f32.mrf.mxu0
    %v2395 = vadd.f32 %v2354, %v2394
    %v2396 = vpop.f32.mrf.mxu0
    %v2397 = vpop.f32.mrf.mxu0
    %v2398 = vadd.f32 %v2357, %v2397
    %v2399 = vpop.f32.mrf.mxu0
    %2400 = vdwg.mxu0
    %2401 = vmatprep.subr.bf16.mxu0 0
    %2402 = vmatpush1.bf16.msra.mxu0 %v1821
    %2403 = vmatprep.subr.bf16.mxu0 0
    %2404 = vmatpush1.bf16.msra.mxu0 %v1820
    %2405 = vmatprep.subr.bf16.mxu0 0
    %2406 = vmatpush1.bf16.msra.mxu0 %v1819
    %2407 = vmatprep.subr.bf16.mxu0 0
    %2408 = vmatpush1.bf16.msra.mxu0 %v1818
    %2409 = vmatprep.subr.bf16.mxu0 0
    %2410 = vmatpush1.bf16.msra.mxu0 %v1817
    %2411 = vmatprep.subr.bf16.mxu0 0
    %2412 = vmatpush1.bf16.msra.mxu0 %v1816
    %2413 = vmatprep.subr.bf16.mxu0 0
    %2414 = vmatpush1.bf16.msra.mxu0 %v1815
    %2415 = vmatprep.subr.bf16.mxu0 0
    %2416 = vmatpush1.bf16.msra.mxu0 %v1814
    %2417 = vmatprep.subr.bf16.mxu0 0
    %2418 = vmatpush2.bf16.msra.mxu0 %v1829
    %2419 = vmatprep.subr.bf16.mxu0 0
    %2420 = vmatpush2.bf16.msra.mxu0 %v1828
    %2421 = vmatprep.subr.bf16.mxu0 0
    %2422 = vmatpush2.bf16.msra.mxu0 %v1827
    %2423 = vmatprep.subr.bf16.mxu0 0
    %2424 = vmatpush2.bf16.msra.mxu0 %v1826
    %2425 = vmatprep.subr.bf16.mxu0 0
    %2426 = vmatpush2.bf16.msra.mxu0 %v1825
    %2427 = vmatprep.subr.bf16.mxu0 0
    %2428 = vmatpush2.bf16.msra.mxu0 %v1824
    %2429 = vmatprep.subr.bf16.mxu0 0
    %2430 = vmatpush2.bf16.msra.mxu0 %v1823
    %2431 = vmatprep.subr.bf16.mxu0 0
    %2432 = vmatpush2.bf16.msra.mxu0 %v1822
    %2433 = vmatprep.mubr.bf16.mxu0 %v685
    %2434 = vmatmul.mubr.bf16.gmra.mxu0 %v684
    %v2435 = vpop.f32.mrf.mxu0
    %v2436 = vadd.f32 %v2395, %v2435
    %v2437 = vpop.f32.mrf.mxu0
    %v2438 = vpop.f32.mrf.mxu0
    %v2439 = vadd.f32 %v2398, %v2438
    %v2440 = vpop.f32.mrf.mxu0
    %2441 = vdwg.mxu0
    %2442 = vmatprep.subr.bf16.mxu0 0
    %2443 = vmatpush1.bf16.msra.mxu0 %v1837
    %2444 = vmatprep.subr.bf16.mxu0 0
    %2445 = vmatpush1.bf16.msra.mxu0 %v1836
    %2446 = vmatprep.subr.bf16.mxu0 0
    %2447 = vmatpush1.bf16.msra.mxu0 %v1835
    %2448 = vmatprep.subr.bf16.mxu0 0
    %2449 = vmatpush1.bf16.msra.mxu0 %v1834
    %2450 = vmatprep.subr.bf16.mxu0 0
    %2451 = vmatpush1.bf16.msra.mxu0 %v1833
    %2452 = vmatprep.subr.bf16.mxu0 0
    %2453 = vmatpush1.bf16.msra.mxu0 %v1832
    %2454 = vmatprep.subr.bf16.mxu0 0
    %2455 = vmatpush1.bf16.msra.mxu0 %v1831
    %2456 = vmatprep.subr.bf16.mxu0 0
    %2457 = vmatpush1.bf16.msra.mxu0 %v1830
    %2458 = vmatprep.subr.bf16.mxu0 0
    %2459 = vmatpush2.bf16.msra.mxu0 %v1845
    %2460 = vmatprep.subr.bf16.mxu0 0
    %2461 = vmatpush2.bf16.msra.mxu0 %v1844
    %2462 = vmatprep.subr.bf16.mxu0 0
    %2463 = vmatpush2.bf16.msra.mxu0 %v1843
    %2464 = vmatprep.subr.bf16.mxu0 0
    %2465 = vmatpush2.bf16.msra.mxu0 %v1842
    %2466 = vmatprep.subr.bf16.mxu0 0
    %2467 = vmatpush2.bf16.msra.mxu0 %v1841
    %2468 = vmatprep.subr.bf16.mxu0 0
    %2469 = vmatpush2.bf16.msra.mxu0 %v1840
    %2470 = vmatprep.subr.bf16.mxu0 0
    %2471 = vmatpush2.bf16.msra.mxu0 %v1839
    %2472 = vmatprep.subr.bf16.mxu0 0
    %2473 = vmatpush2.bf16.msra.mxu0 %v1838
    %2474 = vmatprep.mubr.bf16.mxu0 %v687
    %2475 = vmatmul.mubr.bf16.gmra.mxu0 %v686
    %v2476 = vpop.f32.mrf.mxu0
    %v2477 = vadd.f32 %v2436, %v2476
    %v2478 = vpop.f32.mrf.mxu0
    %v2479 = vpop.f32.mrf.mxu0
    %v2480 = vadd.f32 %v2439, %v2479
    %v2481 = vpop.f32.mrf.mxu0
    %2482 = vdwg.mxu0
    %2483 = vmatprep.subr.bf16.mxu0 0
    %2484 = vmatpush1.bf16.msra.mxu0 %v1853
    %2485 = vmatprep.subr.bf16.mxu0 0
    %2486 = vmatpush1.bf16.msra.mxu0 %v1852
    %2487 = vmatprep.subr.bf16.mxu0 0
    %2488 = vmatpush1.bf16.msra.mxu0 %v1851
    %2489 = vmatprep.subr.bf16.mxu0 0
    %2490 = vmatpush1.bf16.msra.mxu0 %v1850
    %2491 = vmatprep.subr.bf16.mxu0 0
    %2492 = vmatpush1.bf16.msra.mxu0 %v1849
    %2493 = vmatprep.subr.bf16.mxu0 0
    %2494 = vmatpush1.bf16.msra.mxu0 %v1848
    %2495 = vmatprep.subr.bf16.mxu0 0
    %2496 = vmatpush1.bf16.msra.mxu0 %v1847
    %2497 = vmatprep.subr.bf16.mxu0 0
    %2498 = vmatpush1.bf16.msra.mxu0 %v1846
    %2499 = vmatprep.subr.bf16.mxu0 0
    %2500 = vmatpush2.bf16.msra.mxu0 %v1861
    %2501 = vmatprep.subr.bf16.mxu0 0
    %2502 = vmatpush2.bf16.msra.mxu0 %v1860
    %2503 = vmatprep.subr.bf16.mxu0 0
    %2504 = vmatpush2.bf16.msra.mxu0 %v1859
    %2505 = vmatprep.subr.bf16.mxu0 0
    %2506 = vmatpush2.bf16.msra.mxu0 %v1858
    %2507 = vmatprep.subr.bf16.mxu0 0
    %2508 = vmatpush2.bf16.msra.mxu0 %v1857
    %2509 = vmatprep.subr.bf16.mxu0 0
    %2510 = vmatpush2.bf16.msra.mxu0 %v1856
    %2511 = vmatprep.subr.bf16.mxu0 0
    %2512 = vmatpush2.bf16.msra.mxu0 %v1855
    %2513 = vmatprep.subr.bf16.mxu0 0
    %2514 = vmatpush2.bf16.msra.mxu0 %v1854
    %2515 = vmatprep.mubr.bf16.mxu0 %v689
    %2516 = vmatmul.mubr.bf16.gmra.mxu0 %v688
    %v2517 = vpop.f32.mrf.mxu0
    %v2518 = vadd.f32 %v2477, %v2517
    %v2519 = vpop.f32.mrf.mxu0
    %v2520 = vpop.f32.mrf.mxu0
    %v2521 = vadd.f32 %v2480, %v2520
    %v2522 = vpop.f32.mrf.mxu0
    %2523 = vdwg.mxu0
    %2524 = vmatprep.subr.bf16.mxu0 0
    %2525 = vmatpush1.bf16.msra.mxu0 %v1869
    %2526 = vmatprep.subr.bf16.mxu0 0
    %2527 = vmatpush1.bf16.msra.mxu0 %v1868
    %2528 = vmatprep.subr.bf16.mxu0 0
    %2529 = vmatpush1.bf16.msra.mxu0 %v1867
    %2530 = vmatprep.subr.bf16.mxu0 0
    %2531 = vmatpush1.bf16.msra.mxu0 %v1866
    %2532 = vmatprep.subr.bf16.mxu0 0
    %2533 = vmatpush1.bf16.msra.mxu0 %v1865
    %2534 = vmatprep.subr.bf16.mxu0 0
    %2535 = vmatpush1.bf16.msra.mxu0 %v1864
    %2536 = vmatprep.subr.bf16.mxu0 0
    %2537 = vmatpush1.bf16.msra.mxu0 %v1863
    %2538 = vmatprep.subr.bf16.mxu0 0
    %2539 = vmatpush1.bf16.msra.mxu0 %v1862
    %2540 = vmatprep.subr.bf16.mxu0 0
    %2541 = vmatpush2.bf16.msra.mxu0 %v1877
    %2542 = vmatprep.subr.bf16.mxu0 0
    %2543 = vmatpush2.bf16.msra.mxu0 %v1876
    %2544 = vmatprep.subr.bf16.mxu0 0
    %2545 = vmatpush2.bf16.msra.mxu0 %v1875
    %2546 = vmatprep.subr.bf16.mxu0 0
    %2547 = vmatpush2.bf16.msra.mxu0 %v1874
    %2548 = vmatprep.subr.bf16.mxu0 0
    %2549 = vmatpush2.bf16.msra.mxu0 %v1873
    %2550 = vmatprep.subr.bf16.mxu0 0
    %2551 = vmatpush2.bf16.msra.mxu0 %v1872
    %2552 = vmatprep.subr.bf16.mxu0 0
    %2553 = vmatpush2.bf16.msra.mxu0 %v1871
    %2554 = vmatprep.subr.bf16.mxu0 0
    %2555 = vmatpush2.bf16.msra.mxu0 %v1870
    %2556 = vmatprep.mubr.bf16.mxu0 %v691
    %2557 = vmatmul.mubr.bf16.gmra.mxu0 %v690
    %v2558 = vpop.f32.mrf.mxu0
    %v2559 = vadd.f32 %v2518, %v2558
    %v2560 = vpop.f32.mrf.mxu0
    %v2561 = vpop.f32.mrf.mxu0
    %v2562 = vadd.f32 %v2521, %v2561
    %v2563 = vpop.f32.mrf.mxu0
    %2564 = vdwg.mxu0
    %2565 = vmatprep.subr.bf16.mxu0 0
    %2566 = vmatpush1.bf16.msra.mxu0 %v1885
    %2567 = vmatprep.subr.bf16.mxu0 0
    %2568 = vmatpush1.bf16.msra.mxu0 %v1884
    %2569 = vmatprep.subr.bf16.mxu0 0
    %2570 = vmatpush1.bf16.msra.mxu0 %v1883
    %2571 = vmatprep.subr.bf16.mxu0 0
    %2572 = vmatpush1.bf16.msra.mxu0 %v1882
    %2573 = vmatprep.subr.bf16.mxu0 0
    %2574 = vmatpush1.bf16.msra.mxu0 %v1881
    %2575 = vmatprep.subr.bf16.mxu0 0
    %2576 = vmatpush1.bf16.msra.mxu0 %v1880
    %2577 = vmatprep.subr.bf16.mxu0 0
    %2578 = vmatpush1.bf16.msra.mxu0 %v1879
    %2579 = vmatprep.subr.bf16.mxu0 0
    %2580 = vmatpush1.bf16.msra.mxu0 %v1878
    %2581 = vmatprep.subr.bf16.mxu0 0
    %2582 = vmatpush2.bf16.msra.mxu0 %v1893
    %2583 = vmatprep.subr.bf16.mxu0 0
    %2584 = vmatpush2.bf16.msra.mxu0 %v1892
    %2585 = vmatprep.subr.bf16.mxu0 0
    %2586 = vmatpush2.bf16.msra.mxu0 %v1891
    %2587 = vmatprep.subr.bf16.mxu0 0
    %2588 = vmatpush2.bf16.msra.mxu0 %v1890
    %2589 = vmatprep.subr.bf16.mxu0 0
    %2590 = vmatpush2.bf16.msra.mxu0 %v1889
    %2591 = vmatprep.subr.bf16.mxu0 0
    %2592 = vmatpush2.bf16.msra.mxu0 %v1888
    %2593 = vmatprep.subr.bf16.mxu0 0
    %2594 = vmatpush2.bf16.msra.mxu0 %v1887
    %2595 = vmatprep.subr.bf16.mxu0 0
    %2596 = vmatpush2.bf16.msra.mxu0 %v1886
    %2597 = vmatprep.mubr.bf16.mxu0 %v693
    %2598 = vmatmul.mubr.bf16.gmra.mxu0 %v692
    %v2599 = vpop.f32.mrf.mxu0
    %v2600 = vadd.f32 %v2559, %v2599
    %v2601 = vpop.f32.mrf.mxu0
    %v2602 = vpop.f32.mrf.mxu0
    %v2603 = vadd.f32 %v2562, %v2602
    %v2604 = vpop.f32.mrf.mxu0
    %2605 = vdwg.mxu0
    %2606 = vmatprep.subr.bf16.mxu0 0
    %2607 = vmatpush1.bf16.msra.mxu0 %v1901
    %2608 = vmatprep.subr.bf16.mxu0 0
    %2609 = vmatpush1.bf16.msra.mxu0 %v1900
    %2610 = vmatprep.subr.bf16.mxu0 0
    %2611 = vmatpush1.bf16.msra.mxu0 %v1899
    %2612 = vmatprep.subr.bf16.mxu0 0
    %2613 = vmatpush1.bf16.msra.mxu0 %v1898
    %2614 = vmatprep.subr.bf16.mxu0 0
    %2615 = vmatpush1.bf16.msra.mxu0 %v1897
    %2616 = vmatprep.subr.bf16.mxu0 0
    %2617 = vmatpush1.bf16.msra.mxu0 %v1896
    %2618 = vmatprep.subr.bf16.mxu0 0
    %2619 = vmatpush1.bf16.msra.mxu0 %v1895
    %2620 = vmatprep.subr.bf16.mxu0 0
    %2621 = vmatpush1.bf16.msra.mxu0 %v1894
    %2622 = vmatprep.subr.bf16.mxu0 0
    %2623 = vmatpush2.bf16.msra.mxu0 %v1909
    %2624 = vmatprep.subr.bf16.mxu0 0
    %2625 = vmatpush2.bf16.msra.mxu0 %v1908
    %2626 = vmatprep.subr.bf16.mxu0 0
    %2627 = vmatpush2.bf16.msra.mxu0 %v1907
    %2628 = vmatprep.subr.bf16.mxu0 0
    %2629 = vmatpush2.bf16.msra.mxu0 %v1906
    %2630 = vmatprep.subr.bf16.mxu0 0
    %2631 = vmatpush2.bf16.msra.mxu0 %v1905
    %2632 = vmatprep.subr.bf16.mxu0 0
    %2633 = vmatpush2.bf16.msra.mxu0 %v1904
    %2634 = vmatprep.subr.bf16.mxu0 0
    %2635 = vmatpush2.bf16.msra.mxu0 %v1903
    %2636 = vmatprep.subr.bf16.mxu0 0
    %2637 = vmatpush2.bf16.msra.mxu0 %v1902
    %2638 = vmatprep.mubr.bf16.mxu0 %v695
    %2639 = vmatmul.mubr.bf16.gmra.mxu0 %v694
    %v2640 = vpop.f32.mrf.mxu0
    %v2641 = vadd.f32 %v2600, %v2640
    %v2642 = vpop.f32.mrf.mxu0
    %v2643 = vpop.f32.mrf.mxu0
    %v2644 = vadd.f32 %v2603, %v2643
    %v2645 = vpop.f32.mrf.mxu0
    %2646 = vdwg.mxu0
    %2647 = vmatprep.subr.bf16.mxu0 0
    %2648 = vmatpush1.bf16.msra.mxu0 %v1917
    %2649 = vmatprep.subr.bf16.mxu0 0
    %2650 = vmatpush1.bf16.msra.mxu0 %v1916
    %2651 = vmatprep.subr.bf16.mxu0 0
    %2652 = vmatpush1.bf16.msra.mxu0 %v1915
    %2653 = vmatprep.subr.bf16.mxu0 0
    %2654 = vmatpush1.bf16.msra.mxu0 %v1914
    %2655 = vmatprep.subr.bf16.mxu0 0
    %2656 = vmatpush1.bf16.msra.mxu0 %v1913
    %2657 = vmatprep.subr.bf16.mxu0 0
    %2658 = vmatpush1.bf16.msra.mxu0 %v1912
    %2659 = vmatprep.subr.bf16.mxu0 0
    %2660 = vmatpush1.bf16.msra.mxu0 %v1911
    %2661 = vmatprep.subr.bf16.mxu0 0
    %2662 = vmatpush1.bf16.msra.mxu0 %v1910
    %2663 = vmatprep.subr.bf16.mxu0 0
    %2664 = vmatpush2.bf16.msra.mxu0 %v1925
    %2665 = vmatprep.subr.bf16.mxu0 0
    %2666 = vmatpush2.bf16.msra.mxu0 %v1924
    %2667 = vmatprep.subr.bf16.mxu0 0
    %2668 = vmatpush2.bf16.msra.mxu0 %v1923
    %2669 = vmatprep.subr.bf16.mxu0 0
    %2670 = vmatpush2.bf16.msra.mxu0 %v1922
    %2671 = vmatprep.subr.bf16.mxu0 0
    %2672 = vmatpush2.bf16.msra.mxu0 %v1921
    %2673 = vmatprep.subr.bf16.mxu0 0
    %2674 = vmatpush2.bf16.msra.mxu0 %v1920
    %2675 = vmatprep.subr.bf16.mxu0 0
    %2676 = vmatpush2.bf16.msra.mxu0 %v1919
    %2677 = vmatprep.subr.bf16.mxu0 0
    %2678 = vmatpush2.bf16.msra.mxu0 %v1918
    %2679 = vmatprep.mubr.bf16.mxu0 %v697
    %2680 = vmatmul.mubr.bf16.gmra.mxu0 %v696
    %v2681 = vpop.f32.mrf.mxu0
    %v2682 = vadd.f32 %v2641, %v2681
    %v2683 = vpop.f32.mrf.mxu0
    %v2684 = vpop.f32.mrf.mxu0
    %v2685 = vadd.f32 %v2644, %v2684
    %v2686 = vpop.f32.mrf.mxu0
    %2687 = vdwg.mxu0
    %2688 = vmatprep.subr.bf16.mxu0 0
    %2689 = vmatpush1.bf16.msra.mxu0 %v1933
    %2690 = vmatprep.subr.bf16.mxu0 0
    %2691 = vmatpush1.bf16.msra.mxu0 %v1932
    %2692 = vmatprep.subr.bf16.mxu0 0
    %2693 = vmatpush1.bf16.msra.mxu0 %v1931
    %2694 = vmatprep.subr.bf16.mxu0 0
    %2695 = vmatpush1.bf16.msra.mxu0 %v1930
    %2696 = vmatprep.subr.bf16.mxu0 0
    %2697 = vmatpush1.bf16.msra.mxu0 %v1929
    %2698 = vmatprep.subr.bf16.mxu0 0
    %2699 = vmatpush1.bf16.msra.mxu0 %v1928
    %2700 = vmatprep.subr.bf16.mxu0 0
    %2701 = vmatpush1.bf16.msra.mxu0 %v1927
    %2702 = vmatprep.subr.bf16.mxu0 0
    %2703 = vmatpush1.bf16.msra.mxu0 %v1926
    %2704 = vmatprep.subr.bf16.mxu0 0
    %2705 = vmatpush2.bf16.msra.mxu0 %v1941
    %2706 = vmatprep.subr.bf16.mxu0 0
    %2707 = vmatpush2.bf16.msra.mxu0 %v1940
    %2708 = vmatprep.subr.bf16.mxu0 0
    %2709 = vmatpush2.bf16.msra.mxu0 %v1939
    %2710 = vmatprep.subr.bf16.mxu0 0
    %2711 = vmatpush2.bf16.msra.mxu0 %v1938
    %2712 = vmatprep.subr.bf16.mxu0 0
    %2713 = vmatpush2.bf16.msra.mxu0 %v1937
    %2714 = vmatprep.subr.bf16.mxu0 0
    %2715 = vmatpush2.bf16.msra.mxu0 %v1936
    %2716 = vmatprep.subr.bf16.mxu0 0
    %2717 = vmatpush2.bf16.msra.mxu0 %v1935
    %2718 = vmatprep.subr.bf16.mxu0 0
    %2719 = vmatpush2.bf16.msra.mxu0 %v1934
    %2720 = vmatprep.mubr.bf16.mxu0 %v699
    %2721 = vmatmul.mubr.bf16.gmra.mxu0 %v698
    %v2722 = vpop.f32.mrf.mxu0
    %v2723 = vadd.f32 %v2682, %v2722
    %v2724 = vpop.f32.mrf.mxu0
    %v2725 = vpop.f32.mrf.mxu0
    %v2726 = vadd.f32 %v2685, %v2725
    %v2727 = vpop.f32.mrf.mxu0
    %2728 = vdwg.mxu0
    %2729 = vmatprep.subr.bf16.mxu0 0
    %2730 = vmatpush1.bf16.msra.mxu0 %v1949
    %2731 = vmatprep.subr.bf16.mxu0 0
    %2732 = vmatpush1.bf16.msra.mxu0 %v1948
    %2733 = vmatprep.subr.bf16.mxu0 0
    %2734 = vmatpush1.bf16.msra.mxu0 %v1947
    %2735 = vmatprep.subr.bf16.mxu0 0
    %2736 = vmatpush1.bf16.msra.mxu0 %v1946
    %2737 = vmatprep.subr.bf16.mxu0 0
    %2738 = vmatpush1.bf16.msra.mxu0 %v1945
    %2739 = vmatprep.subr.bf16.mxu0 0
    %2740 = vmatpush1.bf16.msra.mxu0 %v1944
    %2741 = vmatprep.subr.bf16.mxu0 0
    %2742 = vmatpush1.bf16.msra.mxu0 %v1943
    %2743 = vmatprep.subr.bf16.mxu0 0
    %2744 = vmatpush1.bf16.msra.mxu0 %v1942
    %2745 = vmatprep.subr.bf16.mxu0 0
    %2746 = vmatpush2.bf16.msra.mxu0 %v1957
    %2747 = vmatprep.subr.bf16.mxu0 0
    %2748 = vmatpush2.bf16.msra.mxu0 %v1956
    %2749 = vmatprep.subr.bf16.mxu0 0
    %2750 = vmatpush2.bf16.msra.mxu0 %v1955
    %2751 = vmatprep.subr.bf16.mxu0 0
    %2752 = vmatpush2.bf16.msra.mxu0 %v1954
    %2753 = vmatprep.subr.bf16.mxu0 0
    %2754 = vmatpush2.bf16.msra.mxu0 %v1953
    %2755 = vmatprep.subr.bf16.mxu0 0
    %2756 = vmatpush2.bf16.msra.mxu0 %v1952
    %2757 = vmatprep.subr.bf16.mxu0 0
    %2758 = vmatpush2.bf16.msra.mxu0 %v1951
    %2759 = vmatprep.subr.bf16.mxu0 0
    %2760 = vmatpush2.bf16.msra.mxu0 %v1950
    %2761 = vmatprep.mubr.bf16.mxu0 %v701
    %2762 = vmatmul.mubr.bf16.gmra.mxu0 %v700
    %v2763 = vpop.f32.mrf.mxu0
    %v2764 = vadd.f32 %v2723, %v2763
    %v2765 = vpop.f32.mrf.mxu0
    %v2766 = vpop.f32.mrf.mxu0
    %v2767 = vadd.f32 %v2726, %v2766
    %v2768 = vpop.f32.mrf.mxu0
    %2769 = vdwg.mxu0
    %2770 = vmatprep.subr.bf16.mxu0 0
    %2771 = vmatpush1.bf16.msra.mxu0 %v1965
    %2772 = vmatprep.subr.bf16.mxu0 0
    %2773 = vmatpush1.bf16.msra.mxu0 %v1964
    %2774 = vmatprep.subr.bf16.mxu0 0
    %2775 = vmatpush1.bf16.msra.mxu0 %v1963
    %2776 = vmatprep.subr.bf16.mxu0 0
    %2777 = vmatpush1.bf16.msra.mxu0 %v1962
    %2778 = vmatprep.subr.bf16.mxu0 0
    %2779 = vmatpush1.bf16.msra.mxu0 %v1961
    %2780 = vmatprep.subr.bf16.mxu0 0
    %2781 = vmatpush1.bf16.msra.mxu0 %v1960
    %2782 = vmatprep.subr.bf16.mxu0 0
    %2783 = vmatpush1.bf16.msra.mxu0 %v1959
    %2784 = vmatprep.subr.bf16.mxu0 0
    %2785 = vmatpush1.bf16.msra.mxu0 %v1958
    %2786 = vmatprep.subr.bf16.mxu0 0
    %2787 = vmatpush2.bf16.msra.mxu0 %v1973
    %2788 = vmatprep.subr.bf16.mxu0 0
    %2789 = vmatpush2.bf16.msra.mxu0 %v1972
    %2790 = vmatprep.subr.bf16.mxu0 0
    %2791 = vmatpush2.bf16.msra.mxu0 %v1971
    %2792 = vmatprep.subr.bf16.mxu0 0
    %2793 = vmatpush2.bf16.msra.mxu0 %v1970
    %2794 = vmatprep.subr.bf16.mxu0 0
    %2795 = vmatpush2.bf16.msra.mxu0 %v1969
    %2796 = vmatprep.subr.bf16.mxu0 0
    %2797 = vmatpush2.bf16.msra.mxu0 %v1968
    %2798 = vmatprep.subr.bf16.mxu0 0
    %2799 = vmatpush2.bf16.msra.mxu0 %v1967
    %2800 = vmatprep.subr.bf16.mxu0 0
    %2801 = vmatpush2.bf16.msra.mxu0 %v1966
    %2802 = vmatprep.mubr.bf16.mxu0 %v703
    %2803 = vmatmul.mubr.bf16.gmra.mxu0 %v702
    %v2804 = vpop.f32.mrf.mxu0
    %v2805 = vadd.f32 %v2764, %v2804
    %v2806 = vpop.f32.mrf.mxu0
    %v2807 = vpop.f32.mrf.mxu0
    %v2808 = vadd.f32 %v2767, %v2807
    %v2809 = vpop.f32.mrf.mxu0
    %2810 = vdwg.mxu0
    %2811 = vmatprep.subr.bf16.mxu0 0
    %2812 = vmatpush1.bf16.msra.mxu0 %v1981
    %2813 = vmatprep.subr.bf16.mxu0 0
    %2814 = vmatpush1.bf16.msra.mxu0 %v1980
    %2815 = vmatprep.subr.bf16.mxu0 0
    %2816 = vmatpush1.bf16.msra.mxu0 %v1979
    %2817 = vmatprep.subr.bf16.mxu0 0
    %2818 = vmatpush1.bf16.msra.mxu0 %v1978
    %2819 = vmatprep.subr.bf16.mxu0 0
    %2820 = vmatpush1.bf16.msra.mxu0 %v1977
    %2821 = vmatprep.subr.bf16.mxu0 0
    %2822 = vmatpush1.bf16.msra.mxu0 %v1976
    %2823 = vmatprep.subr.bf16.mxu0 0
    %2824 = vmatpush1.bf16.msra.mxu0 %v1975
    %2825 = vmatprep.subr.bf16.mxu0 0
    %2826 = vmatpush1.bf16.msra.mxu0 %v1974
    %2827 = vmatprep.subr.bf16.mxu0 0
    %2828 = vmatpush2.bf16.msra.mxu0 %v1989
    %2829 = vmatprep.subr.bf16.mxu0 0
    %2830 = vmatpush2.bf16.msra.mxu0 %v1988
    %2831 = vmatprep.subr.bf16.mxu0 0
    %2832 = vmatpush2.bf16.msra.mxu0 %v1987
    %2833 = vmatprep.subr.bf16.mxu0 0
    %2834 = vmatpush2.bf16.msra.mxu0 %v1986
    %2835 = vmatprep.subr.bf16.mxu0 0
    %2836 = vmatpush2.bf16.msra.mxu0 %v1985
    %2837 = vmatprep.subr.bf16.mxu0 0
    %2838 = vmatpush2.bf16.msra.mxu0 %v1984
    %2839 = vmatprep.subr.bf16.mxu0 0
    %2840 = vmatpush2.bf16.msra.mxu0 %v1983
    %2841 = vmatprep.subr.bf16.mxu0 0
    %2842 = vmatpush2.bf16.msra.mxu0 %v1982
    %2843 = vmatprep.mubr.bf16.mxu0 %v705
    %2844 = vmatmul.mubr.bf16.gmra.mxu0 %v704
    %v2845 = vpop.f32.mrf.mxu0
    %v2846 = vadd.f32 %v2805, %v2845
    %v2847 = vpop.f32.mrf.mxu0
    %v2848 = vpop.f32.mrf.mxu0
    %v2849 = vadd.f32 %v2808, %v2848
    %v2850 = vpop.f32.mrf.mxu0
    %2851 = vdwg.mxu0
    %2852 = vmatprep.subr.bf16.mxu0 0
    %2853 = vmatpush1.bf16.msra.mxu0 %v1997
    %2854 = vmatprep.subr.bf16.mxu0 0
    %2855 = vmatpush1.bf16.msra.mxu0 %v1996
    %2856 = vmatprep.subr.bf16.mxu0 0
    %2857 = vmatpush1.bf16.msra.mxu0 %v1995
    %2858 = vmatprep.subr.bf16.mxu0 0
    %2859 = vmatpush1.bf16.msra.mxu0 %v1994
    %2860 = vmatprep.subr.bf16.mxu0 0
    %2861 = vmatpush1.bf16.msra.mxu0 %v1993
    %2862 = vmatprep.subr.bf16.mxu0 0
    %2863 = vmatpush1.bf16.msra.mxu0 %v1992
    %2864 = vmatprep.subr.bf16.mxu0 0
    %2865 = vmatpush1.bf16.msra.mxu0 %v1991
    %2866 = vmatprep.subr.bf16.mxu0 0
    %2867 = vmatpush1.bf16.msra.mxu0 %v1990
    %2868 = vmatprep.subr.bf16.mxu0 0
    %2869 = vmatpush2.bf16.msra.mxu0 %v2005
    %2870 = vmatprep.subr.bf16.mxu0 0
    %2871 = vmatpush2.bf16.msra.mxu0 %v2004
    %2872 = vmatprep.subr.bf16.mxu0 0
    %2873 = vmatpush2.bf16.msra.mxu0 %v2003
    %2874 = vmatprep.subr.bf16.mxu0 0
    %2875 = vmatpush2.bf16.msra.mxu0 %v2002
    %2876 = vmatprep.subr.bf16.mxu0 0
    %2877 = vmatpush2.bf16.msra.mxu0 %v2001
    %2878 = vmatprep.subr.bf16.mxu0 0
    %2879 = vmatpush2.bf16.msra.mxu0 %v2000
    %2880 = vmatprep.subr.bf16.mxu0 0
    %2881 = vmatpush2.bf16.msra.mxu0 %v1999
    %2882 = vmatprep.subr.bf16.mxu0 0
    %2883 = vmatpush2.bf16.msra.mxu0 %v1998
    %2884 = vmatprep.mubr.bf16.mxu0 %v707
    %2885 = vmatmul.mubr.bf16.gmra.mxu0 %v706
    %v2886 = vpop.f32.mrf.mxu0
    %v2887 = vadd.f32 %v2846, %v2886
    %v2888 = vpop.f32.mrf.mxu0
    %v2889 = vpop.f32.mrf.mxu0
    %v2890 = vadd.f32 %v2849, %v2889
    %v2891 = vpop.f32.mrf.mxu0
    %2892 = vdwg.mxu0
    %2893 = vmatprep.subr.bf16.mxu0 0
    %2894 = vmatpush1.bf16.msra.mxu0 %v2013
    %2895 = vmatprep.subr.bf16.mxu0 0
    %2896 = vmatpush1.bf16.msra.mxu0 %v2012
    %2897 = vmatprep.subr.bf16.mxu0 0
    %2898 = vmatpush1.bf16.msra.mxu0 %v2011
    %2899 = vmatprep.subr.bf16.mxu0 0
    %2900 = vmatpush1.bf16.msra.mxu0 %v2010
    %2901 = vmatprep.subr.bf16.mxu0 0
    %2902 = vmatpush1.bf16.msra.mxu0 %v2009
    %2903 = vmatprep.subr.bf16.mxu0 0
    %2904 = vmatpush1.bf16.msra.mxu0 %v2008
    %2905 = vmatprep.subr.bf16.mxu0 0
    %2906 = vmatpush1.bf16.msra.mxu0 %v2007
    %2907 = vmatprep.subr.bf16.mxu0 0
    %2908 = vmatpush1.bf16.msra.mxu0 %v2006
    %2909 = vmatprep.subr.bf16.mxu0 0
    %2910 = vmatpush2.bf16.msra.mxu0 %v2021
    %2911 = vmatprep.subr.bf16.mxu0 0
    %2912 = vmatpush2.bf16.msra.mxu0 %v2020
    %2913 = vmatprep.subr.bf16.mxu0 0
    %2914 = vmatpush2.bf16.msra.mxu0 %v2019
    %2915 = vmatprep.subr.bf16.mxu0 0
    %2916 = vmatpush2.bf16.msra.mxu0 %v2018
    %2917 = vmatprep.subr.bf16.mxu0 0
    %2918 = vmatpush2.bf16.msra.mxu0 %v2017
    %2919 = vmatprep.subr.bf16.mxu0 0
    %2920 = vmatpush2.bf16.msra.mxu0 %v2016
    %2921 = vmatprep.subr.bf16.mxu0 0
    %2922 = vmatpush2.bf16.msra.mxu0 %v2015
    %2923 = vmatprep.subr.bf16.mxu0 0
    %2924 = vmatpush2.bf16.msra.mxu0 %v2014
    %2925 = vmatprep.mubr.bf16.mxu0 %v709
    %2926 = vmatmul.mubr.bf16.gmra.mxu0 %v708
    %v2927 = vpop.f32.mrf.mxu0
    %v2928 = vadd.f32 %v2887, %v2927
    %v2929 = vpop.f32.mrf.mxu0
    %v2930 = vpop.f32.mrf.mxu0
    %v2931 = vadd.f32 %v2890, %v2930
    %v2932 = vpop.f32.mrf.mxu0
    %2933 = vdwg.mxu0
    %2934 = vset.pattern.permute.xlu0 1
    %2935 = vperm.xlu0 %2934, %v19
    %v2936 = vpop.permute.xlu0 %2935
    %2938 = vset.pattern.permute.xlu0 1
    %2939 = vperm.xlu0 %2938, %v20
    %v2940 = vpop.permute.xlu0 %2939
    %v2942 = vlaneseq
    %v2943 = vshrl.u32 %v2942, 7
    %v2944 = vsub.s32 1, %v2943
    %v2945 = vrot.slane %v565, %v2944
    %v2946 = vmul.f32 %v2936, %v2945
    %v2947 = vmul.f32 %v2940, %v2945
    %v2948 = vadd.f32 %v2928, %v2946
    %v2949 = vadd.f32 %v2931, %v2947
    %v2950 = vlaneseq
    %v2951 = vshrl.u32 %v2950, 7
    %v2952 = vsub.s32 2, %v2951
    %v2953 = vrot.slane %v565, %v2952
    %v2954 = vadd.f32 %v2948, %v2953
    %v2955 = vadd.f32 %v2949, %v2953
    %2956 = vset.pattern.permute.xlu0 2
    %2957 = vperm.xlu0 %2956, %v19
    %v2958 = vpop.permute.xlu0 %2957
    %2960 = vset.pattern.permute.xlu0 2
    %2961 = vperm.xlu0 %2960, %v20
    %v2962 = vpop.permute.xlu0 %2961
    %v2964 = vmul.f32 %v2954, %v2958
    %v2965 = vmul.f32 %v2955, %v2962
    %vm2966 = vcmask 261120
    %2967 = vst.msk [vmem:[#allocation2] sm:$0xff] %vm2966, %v2964
    %2968 = vst.msk [vmem:[#allocation2 + $0x8] sm:$0xff] %vm2966, %v2965
    // Predicated region
    $region18: #{tpu_custom_call.1} parent=1 // pred_check
      _
    $region19: #{tpu_custom_call.1} parent=1 // pred_check_branch
      %2970 = sbr.rel (0) target = $region21
    $region20: #{tpu_custom_call.1} parent=1 // pred_region
      %s2972 = ssub.s32 256, 256
      %2973 = vsyncadd [#allocation3], %s2972
      %s2974 = sshll.u32 [#allocation2], 4
      %s2975 = int_to_ptr.vmem [resolvable:$true] %s2974
      %2980 = dma.vmem_to_hbm [thread:$0]  %s2975, 256, %s4, [#allocation3], 128, 128, 8
    $region21: #{tpu_custom_call.1} parent=1 // pred_fallthru
      _
    // Predicated region
    $region22: #{tpu_custom_call.1} parent=1 // pred_check
      _
    $region23: #{tpu_custom_call.1} parent=1 // pred_check_branch
      %2982 = sbr.rel (0) target = $region25
    $region24: #{tpu_custom_call.1} parent=1 // pred_region
      %2983 = dma.done [#allocation3], 256
    $region25: #{tpu_custom_call.1} parent=1 // pred_fallthru
      _
    %2984 = vsyncpa [#allocation3], 1

</llo_original>
